<compile_context>
chip_gen: v5e
topology: v5e:2x2
jax: 0.10.0
libtpu: 0.0.40
codegen_flags: <defaults>
</compile_context>

<pallas_src>
import functools

import jax
import jax.numpy as jnp
from jax.experimental import pallas as pl
from jax.experimental.pallas import tpu as pltpu

EPS = 1e-5
_VMEM_LIMIT_BYTES = 48 * 1024 * 1024   # comfortably below v7x's 64 MiB physical VMEM


def _layernorm(h, gamma, beta):
    mu = jnp.mean(h, axis=-1, keepdims=True)
    var = jnp.mean((h - mu) ** 2, axis=-1, keepdims=True)
    return (h - mu) * jax.lax.rsqrt(var + EPS) * gamma + beta


def _seq_tile(n, target=256):
    """Largest multiple-of-8 divisor of n that is <= target (falls back to n)."""
    if n <= target:
        return n
    for t in range(target - target % 8, 7, -8):
        if n % t == 0:
            return t
    return n


# --------------------------------------------------------------------------- #
# Stage 1: x1 = x + attn(norm1(x))        (grid over batch)
# --------------------------------------------------------------------------- #
def attn_kernel(x_ref, qkv_w_ref, proj_w_ref, proj_b_ref, g1_ref, b1_ref,
                o_ref, ctx_ref, *, num_heads, head_dim):
    xb = x_ref[0].astype(jnp.float32)                       # (N, C)
    C = num_heads * head_dim

    h = _layernorm(xb, g1_ref[...], b1_ref[...])

    # Fused, lane-dense qkv projection (bf16 in, f32 accumulation).
    # The q scale (head_dim ** -0.5) is already folded into qkv_w on the host.
    qkv = jnp.dot(h.astype(jnp.bfloat16), qkv_w_ref[...],
                  preferred_element_type=jnp.float32)       # (N, 3C)

    # Static per-head loop; each head writes its context directly into the
    # (N, C) VMEM scratch slice (no concatenate, bounded live intermediates).
    for hd in range(num_heads):
        lo = hd * head_dim
        q_h = qkv[:, 0 * C + lo:0 * C + lo + head_dim].astype(jnp.bfloat16)
        k_h = qkv[:, 1 * C + lo:1 * C + lo + head_dim].astype(jnp.bfloat16)
        v_h = qkv[:, 2 * C + lo:2 * C + lo + head_dim].astype(jnp.bfloat16)

        # q @ k^T without materializing a transpose.
        s = jax.lax.dot_general(q_h, k_h, (((1,), (1,)), ((), ())),
                                preferred_element_type=jnp.float32)   # (N, N)
        s = s - jnp.max(s, axis=-1, keepdims=True)
        p = jnp.exp(s)
        p = p * pl.reciprocal(jnp.sum(p, axis=-1, keepdims=True), approx=True)
        ctx_ref[:, lo:lo + head_dim] = jnp.dot(
            p.astype(jnp.bfloat16), v_h, preferred_element_type=jnp.float32)

    attn_out = jnp.dot(ctx_ref[...].astype(jnp.bfloat16), proj_w_ref[...],
                       preferred_element_type=jnp.float32) + proj_b_ref[...]
    o_ref[0] = (xb + attn_out).astype(o_ref.dtype)


# --------------------------------------------------------------------------- #
# Stage 2: out = x1 + fc2(gelu(fc1(norm2(x1))))     (grid over batch x seq tiles)
# --------------------------------------------------------------------------- #
def mlp_kernel(x_ref, fc1_w_ref, fc1_b_ref, fc2_w_ref, fc2_b_ref,
               g2_ref, b2_ref, o_ref):
    xb = x_ref[0].astype(jnp.float32)                       # (tq, C)
    h = _layernorm(xb, g2_ref[...], b2_ref[...])
    m = jnp.dot(h.astype(jnp.bfloat16), fc1_w_ref[...],
                preferred_element_type=jnp.float32) + fc1_b_ref[...]
    # nn.GELU default is the exact erf form; kept for semantic fidelity.
    # TODO(synk): use approximate=True (tanh -> EUP slot) if accuracy budget allows.
    m = jax.nn.gelu(m, approximate=False)
    m = jnp.dot(m.astype(jnp.bfloat16), fc2_w_ref[...],
                preferred_element_type=jnp.float32) + fc2_b_ref[...]
    o_ref[0] = (xb + m).astype(o_ref.dtype)


# --------------------------------------------------------------------------- #
# Wrappers
# --------------------------------------------------------------------------- #
def _const_spec(shape, grid_rank, single_buffer):
    """BlockSpec for a weight whose block index never changes."""
    zeros = (0,) * len(shape)
    if grid_rank == 1:
        index_map = lambda b: zeros
    else:
        index_map = lambda b, j: zeros
    if single_buffer:
        # Constant block index => fetched once; a single VMEM buffer suffices.
        return pl.BlockSpec(shape, index_map, pipeline_mode=pl.Buffered(1))
    return pl.BlockSpec(shape, index_map)


def _run_attention(x, qkv_w, proj_w, proj_b, g1, b1, *,
                   num_heads, head_dim, single_buffer):
    B, N, C = x.shape
    kern = functools.partial(attn_kernel, num_heads=num_heads, head_dim=head_dim)
    flops = B * (8 * N * C * C + 4 * N * N * C)
    trans = B * (num_heads * N * N + 2 * N)
    bytes_acc = (2 * x.size * x.dtype.itemsize
                 + qkv_w.size * qkv_w.dtype.itemsize
                 + proj_w.size * proj_w.dtype.itemsize
                 + (proj_b.size + g1.size + b1.size) * 4)
    return pl.pallas_call(
        kern,
        out_shape=jax.ShapeDtypeStruct((B, N, C), x.dtype),
        grid=(B,),
        in_specs=[
            pl.BlockSpec((1, N, C), lambda b: (b, 0, 0)),      # x
            _const_spec((C, 3 * C), 1, single_buffer),         # qkv_w  (bf16)
            _const_spec((C, C), 1, single_buffer),             # proj_w (bf16)
            _const_spec((1, C), 1, single_buffer),             # proj_b
            _const_spec((1, C), 1, single_buffer),             # norm1 gamma
            _const_spec((1, C), 1, single_buffer),             # norm1 beta
        ],
        out_specs=pl.BlockSpec((1, N, C), lambda b: (b, 0, 0)),
        scratch_shapes=[pltpu.VMEM((N, C), jnp.float32)],      # per-head context
        compiler_params=pltpu.CompilerParams(
            dimension_semantics=("parallel",),
            vmem_limit_bytes=_VMEM_LIMIT_BYTES),
        cost_estimate=pl.CostEstimate(flops=flops, transcendentals=trans,
                                      bytes_accessed=bytes_acc),
    )(x, qkv_w, proj_w, proj_b, g1, b1)


def _run_mlp(x1, fc1_w, fc1_b, fc2_w, fc2_b, g2, b2, *, single_buffer):
    B, N, C = x1.shape
    H = fc1_w.shape[1]
    tq = _seq_tile(N)
    flops = 4 * B * N * C * H
    trans = B * N * (H + 1)
    bytes_acc = (2 * x1.size * x1.dtype.itemsize
                 + (fc1_w.size + fc2_w.size) * fc1_w.dtype.itemsize
                 + (fc1_b.size + fc2_b.size + g2.size + b2.size) * 4)
    return pl.pallas_call(
        mlp_kernel,
        out_shape=jax.ShapeDtypeStruct((B, N, C), x1.dtype),
        grid=(B, N // tq),
        in_specs=[
            pl.BlockSpec((1, tq, C), lambda b, j: (b, j, 0)),  # x1
            _const_spec((C, H), 2, single_buffer),             # fc1_w (bf16)
            _const_spec((1, H), 2, single_buffer),             # fc1_b
            _const_spec((H, C), 2, single_buffer),             # fc2_w (bf16)
            _const_spec((1, C), 2, single_buffer),             # fc2_b
            _const_spec((1, C), 2, single_buffer),             # norm2 gamma
            _const_spec((1, C), 2, single_buffer),             # norm2 beta
        ],
        out_specs=pl.BlockSpec((1, tq, C), lambda b, j: (b, j, 0)),
        compiler_params=pltpu.CompilerParams(
            dimension_semantics=("parallel", "parallel"),
            vmem_limit_bytes=_VMEM_LIMIT_BYTES),
        cost_estimate=pl.CostEstimate(flops=flops, transcendentals=trans,
                                      bytes_accessed=bytes_acc),
    )(x1, fc1_w, fc1_b, fc2_w, fc2_b, g2, b2)


def block_forward(x, params, *, num_heads):
    B, N, C = x.shape
    head_dim = C // num_heads
    scale = head_dim ** (-0.5)

    # Fold the attention scale into the q third of the qkv weight (qkv_bias=False
    # so this is exact) and cast the large weights to bf16 once; the kernels
    # accumulate every matmul in f32.
    qkv_w = params["qkv_w"].at[:, :C].multiply(scale).astype(jnp.bfloat16)
    proj_w = params["proj_w"].astype(jnp.bfloat16)
    fc1_w = params["fc1_w"].astype(jnp.bfloat16)
    fc2_w = params["fc2_w"].astype(jnp.bfloat16)

    def attn(single_buffer):
        return _run_attention(x, qkv_w, proj_w, params["proj_b"],
                              params["g1"], params["b1"],
                              num_heads=num_heads, head_dim=head_dim,
                              single_buffer=single_buffer)

    def mlp(x1, single_buffer):
        return _run_mlp(x1, fc1_w, params["fc1_b"], fc2_w, params["fc2_b"],
                        params["g2"], params["b2"], single_buffer=single_buffer)

    # pl.Buffered(1) on constant-index weights halves their resident VMEM; fall
    # back to default double-buffering if this jax version rejects it.
    try:
        x1 = attn(True)
    except Exception:
        x1 = attn(False)
    try:
        return mlp(x1, True)
    except Exception:
        return mlp(x1, False)


def init_params(key, dim, mlp_ratio=4.0):
    hidden = int(dim * mlp_ratio)
    ks = jax.random.split(key, 6)
    s = 0.02
    return {
        "qkv_w": s * jax.random.normal(ks[0], (dim, 3 * dim), jnp.float32),
        "proj_w": s * jax.random.normal(ks[1], (dim, dim), jnp.float32),
        "proj_b": s * jax.random.normal(ks[2], (1, dim), jnp.float32),
        "fc1_w": s * jax.random.normal(ks[3], (dim, hidden), jnp.float32),
        "fc1_b": s * jax.random.normal(ks[4], (1, hidden), jnp.float32),
        "fc2_w": s * jax.random.normal(ks[5], (hidden, dim), jnp.float32),
        "fc2_b": jnp.zeros((1, dim), jnp.float32),
        "g1": jnp.ones((1, dim), jnp.float32),
        "b1": jnp.zeros((1, dim), jnp.float32),
        "g2": jnp.ones((1, dim), jnp.float32),
        "b2": jnp.zeros((1, dim), jnp.float32),
    }


if __name__ == "__main__":
    B, N, C = 2, 8, 32
    num_heads = 4

    key = jax.random.PRNGKey(0)
    kx, kp = jax.random.split(key)
    x = jax.random.normal(kx, (B, N, C), jnp.float32)
    params = init_params(kp, C, mlp_ratio=4.0)

    out = block_forward(x, params, num_heads=num_heads)
    jax.block_until_ready(out)

    # Pure-JAX f32 reference of the same math (exact GELU, f32 matmuls).
    def ref(x):
        def ln(h, g, b):
            mu = h.mean(-1, keepdims=True)
            var = ((h - mu) ** 2).mean(-1, keepdims=True)
            return (h - mu) / jnp.sqrt(var + EPS) * g + b
        hd = C // num_heads
        h = ln(x, params["g1"][0], params["b1"][0])
        qkv = h @ params["qkv_w"]
        q, k, v = jnp.split(qkv, 3, axis=-1)
        q = q.reshape(B, N, num_heads, hd).transpose(0, 2, 1, 3) * hd ** -0.5
        k = k.reshape(B, N, num_heads, hd).transpose(0, 2, 1, 3)
        v = v.reshape(B, N, num_heads, hd).transpose(0, 2, 1, 3)
        a = jax.nn.softmax(q @ k.transpose(0, 1, 3, 2), axis=-1)
        o = (a @ v).transpose(0, 2, 1, 3).reshape(B, N, C)
        o = o @ params["proj_w"] + params["proj_b"][0]
        x1 = x + o
        h2 = ln(x1, params["g2"][0], params["b2"][0])
        m = jax.nn.gelu(h2 @ params["fc1_w"] + params["fc1_b"][0],
                        approximate=False)
        m = m @ params["fc2_w"] + params["fc2_b"][0]
        return x1 + m

    ref_out = ref(x)
    # bf16 matmul inputs (with f32 accumulation) loosen the tolerance vs. the
    # pure-f32 reference.
    assert jnp.allclose(out, ref_out, atol=1e-2, rtol=1e-2), (
        float(jnp.max(jnp.abs(out - ref_out))))
    print("KERNEL_OK")
</pallas_src>

<mosaic_0001>
module attributes {stable_mosaic.version = 11 : i64} {
  func.func @attn_kernel(%arg0: i32, %arg1: memref<1x8x32xf32, #tpu.memory_space<vmem>>, %arg2: memref<32x96xbf16, #tpu.memory_space<vmem>>, %arg3: memref<32x32xbf16, #tpu.memory_space<vmem>>, %arg4: memref<1x32xf32, #tpu.memory_space<vmem>>, %arg5: memref<1x32xf32, #tpu.memory_space<vmem>>, %arg6: memref<1x32xf32, #tpu.memory_space<vmem>>, %arg7: memref<1x8x32xf32, #tpu.memory_space<vmem>>, %arg8: memref<8x32xf32, #tpu.memory_space<vmem>>) attributes {dimension_semantics = [#tpu.dimension_semantics<parallel>], iteration_bounds = array<i64: 2>, scalar_prefetch = 0 : i64, scratch_operands = 1 : i64, tpu.core_type = #tpu.core_type<tc>, window_params = [{transform_indices = @transform_0, window_bounds = array<i64: 1, 8, 32>}, {pipeline_mode = #tpu.pipeline_mode<synchronous>, transform_indices = @transform_1, window_bounds = array<i64: 32, 96>}, {pipeline_mode = #tpu.pipeline_mode<synchronous>, transform_indices = @transform_2, window_bounds = array<i64: 32, 32>}, {pipeline_mode = #tpu.pipeline_mode<synchronous>, transform_indices = @transform_3, window_bounds = array<i64: 1, 32>}, {pipeline_mode = #tpu.pipeline_mode<synchronous>, transform_indices = @transform_4, window_bounds = array<i64: 1, 32>}, {pipeline_mode = #tpu.pipeline_mode<synchronous>, transform_indices = @transform_5, window_bounds = array<i64: 1, 32>}, {transform_indices = @transform_6, window_bounds = array<i64: 1, 8, 32>}]} {
    %c0 = arith.constant 0 : index
    %c0_0 = arith.constant 0 : index
    %c0_1 = arith.constant 0 : index
    %0 = vector.load %arg1[%c0, %c0_0, %c0_1] : memref<1x8x32xf32, #tpu.memory_space<vmem>>, vector<1x8x32xf32>
    %1 = vector.shape_cast %0 : vector<1x8x32xf32> to vector<8x32xf32>
    %c0_2 = arith.constant 0 : index
    %c0_3 = arith.constant 0 : index
    %2 = vector.load %arg5[%c0_2, %c0_3] : memref<1x32xf32, #tpu.memory_space<vmem>>, vector<1x32xf32>
    %c0_4 = arith.constant 0 : index
    %c0_5 = arith.constant 0 : index
    %3 = vector.load %arg6[%c0_4, %c0_5] : memref<1x32xf32, #tpu.memory_space<vmem>>, vector<1x32xf32>
    %cst = arith.constant dense<0.000000e+00> : vector<8xf32>
    %4 = vector.multi_reduction <add>, %1, %cst [1] : vector<8x32xf32> to vector<8xf32>
    %5 = vector.shape_cast %4 : vector<8xf32> to vector<8x1xf32>
    %cst_6 = arith.constant 3.200000e+01 : f32
    %6 = vector.broadcast %cst_6 : f32 to vector<8x1xf32>
    %7 = arith.divf %5, %6 : vector<8x1xf32>
    %8 = vector.broadcast %7 : vector<8x1xf32> to vector<8x32xf32>
    %9 = arith.subf %1, %8 : vector<8x32xf32>
    %10 = arith.mulf %9, %9 : vector<8x32xf32>
    %cst_7 = arith.constant dense<0.000000e+00> : vector<8xf32>
    %11 = vector.multi_reduction <add>, %10, %cst_7 [1] : vector<8x32xf32> to vector<8xf32>
    %12 = vector.shape_cast %11 : vector<8xf32> to vector<8x1xf32>
    %cst_8 = arith.constant 3.200000e+01 : f32
    %13 = vector.broadcast %cst_8 : f32 to vector<8x1xf32>
    %14 = arith.divf %12, %13 : vector<8x1xf32>
    %15 = vector.broadcast %7 : vector<8x1xf32> to vector<8x32xf32>
    %16 = arith.subf %1, %15 : vector<8x32xf32>
    %cst_9 = arith.constant 9.99999974E-6 : f32
    %17 = vector.broadcast %cst_9 : f32 to vector<8x1xf32>
    %18 = arith.addf %14, %17 : vector<8x1xf32>
    %19 = math.rsqrt %18 : vector<8x1xf32>
    %20 = vector.broadcast %19 : vector<8x1xf32> to vector<8x32xf32>
    %21 = arith.mulf %16, %20 : vector<8x32xf32>
    %22 = vector.broadcast %2 : vector<1x32xf32> to vector<8x32xf32>
    %23 = arith.mulf %21, %22 : vector<8x32xf32>
    %24 = vector.broadcast %3 : vector<1x32xf32> to vector<8x32xf32>
    %25 = arith.addf %23, %24 : vector<8x32xf32>
    %26 = arith.truncf %25 : vector<8x32xf32> to vector<8x32xbf16>
    %c0_10 = arith.constant 0 : index
    %c0_11 = arith.constant 0 : index
    %27 = vector.load %arg2[%c0_10, %c0_11] : memref<32x96xbf16, #tpu.memory_space<vmem>>, vector<32x96xbf16>
    %cst_12 = arith.constant dense<0.000000e+00> : vector<8x96xf32>
    %28 = tpu.matmul %26, %27, %cst_12 {dimension_numbers = #tpu.dot_dimension_numbers<[1], [0], [0], [1], [0, 0, 1, 1], [], []>} : vector<8x32xbf16>, vector<32x96xbf16>, vector<8x96xf32> -> vector<8x96xf32>
    %29 = vector.extract_strided_slice %28 {offsets = [0, 0], sizes = [8, 8], strides = [1, 1]} : vector<8x96xf32> to vector<8x8xf32>
    %30 = arith.truncf %29 : vector<8x8xf32> to vector<8x8xbf16>
    %31 = vector.extract_strided_slice %28 {offsets = [0, 32], sizes = [8, 8], strides = [1, 1]} : vector<8x96xf32> to vector<8x8xf32>
    %32 = arith.truncf %31 : vector<8x8xf32> to vector<8x8xbf16>
    %33 = vector.extract_strided_slice %28 {offsets = [0, 64], sizes = [8, 8], strides = [1, 1]} : vector<8x96xf32> to vector<8x8xf32>
    %34 = arith.truncf %33 : vector<8x8xf32> to vector<8x8xbf16>
    %cst_13 = arith.constant dense<0.000000e+00> : vector<8x8xf32>
    %35 = tpu.matmul %30, %32, %cst_13 {dimension_numbers = #tpu.dot_dimension_numbers<[1], [1], [0], [0], [0, 0, 1, 0], [], []>} : vector<8x8xbf16>, vector<8x8xbf16>, vector<8x8xf32> -> vector<8x8xf32>
    %cst_14 = arith.constant dense<0xFF800000> : vector<8xf32>
    %36 = vector.multi_reduction <maximumf>, %35, %cst_14 [1] : vector<8x8xf32> to vector<8xf32>
    %37 = vector.shape_cast %36 : vector<8xf32> to vector<8x1xf32>
    %38 = vector.broadcast %37 : vector<8x1xf32> to vector<8x8xf32>
    %39 = arith.subf %35, %38 : vector<8x8xf32>
    %40 = math.exp %39 : vector<8x8xf32>
    %cst_15 = arith.constant dense<0.000000e+00> : vector<8xf32>
    %41 = vector.multi_reduction <add>, %40, %cst_15 [1] : vector<8x8xf32> to vector<8xf32>
    %42 = vector.shape_cast %41 : vector<8xf32> to vector<8x1xf32>
    %43 = tpu.reciprocal %42 {approx = true} : vector<8x1xf32> -> vector<8x1xf32>
    %44 = vector.broadcast %43 : vector<8x1xf32> to vector<8x8xf32>
    %45 = arith.mulf %40, %44 : vector<8x8xf32>
    %46 = arith.truncf %45 : vector<8x8xf32> to vector<8x8xbf16>
    %cst_16 = arith.constant dense<0.000000e+00> : vector<8x8xf32>
    %47 = tpu.matmul %46, %34, %cst_16 {dimension_numbers = #tpu.dot_dimension_numbers<[1], [0], [0], [1], [0, 0, 1, 1], [], []>} : vector<8x8xbf16>, vector<8x8xbf16>, vector<8x8xf32> -> vector<8x8xf32>
    %c0_17 = arith.constant 0 : index
    %c0_18 = arith.constant 0 : index
    %48 = vector.load %arg8[%c0_17, %c0_18] : memref<8x32xf32, #tpu.memory_space<vmem>>, vector<8x8xf32>
    tpu.vector_store %arg8[%c0_17, %c0_18], %47 {strides = array<i32>} : memref<8x32xf32, #tpu.memory_space<vmem>>, vector<8x8xf32>,
    %49 = vector.extract_strided_slice %28 {offsets = [0, 8], sizes = [8, 8], strides = [1, 1]} : vector<8x96xf32> to vector<8x8xf32>
    %50 = arith.truncf %49 : vector<8x8xf32> to vector<8x8xbf16>
    %51 = vector.extract_strided_slice %28 {offsets = [0, 40], sizes = [8, 8], strides = [1, 1]} : vector<8x96xf32> to vector<8x8xf32>
    %52 = arith.truncf %51 : vector<8x8xf32> to vector<8x8xbf16>
    %53 = vector.extract_strided_slice %28 {offsets = [0, 72], sizes = [8, 8], strides = [1, 1]} : vector<8x96xf32> to vector<8x8xf32>
    %54 = arith.truncf %53 : vector<8x8xf32> to vector<8x8xbf16>
    %cst_19 = arith.constant dense<0.000000e+00> : vector<8x8xf32>
    %55 = tpu.matmul %50, %52, %cst_19 {dimension_numbers = #tpu.dot_dimension_numbers<[1], [1], [0], [0], [0, 0, 1, 0], [], []>} : vector<8x8xbf16>, vector<8x8xbf16>, vector<8x8xf32> -> vector<8x8xf32>
    %cst_20 = arith.constant dense<0xFF800000> : vector<8xf32>
    %56 = vector.multi_reduction <maximumf>, %55, %cst_20 [1] : vector<8x8xf32> to vector<8xf32>
    %57 = vector.shape_cast %56 : vector<8xf32> to vector<8x1xf32>
    %58 = vector.broadcast %57 : vector<8x1xf32> to vector<8x8xf32>
    %59 = arith.subf %55, %58 : vector<8x8xf32>
    %60 = math.exp %59 : vector<8x8xf32>
    %cst_21 = arith.constant dense<0.000000e+00> : vector<8xf32>
    %61 = vector.multi_reduction <add>, %60, %cst_21 [1] : vector<8x8xf32> to vector<8xf32>
    %62 = vector.shape_cast %61 : vector<8xf32> to vector<8x1xf32>
    %63 = tpu.reciprocal %62 {approx = true} : vector<8x1xf32> -> vector<8x1xf32>
    %64 = vector.broadcast %63 : vector<8x1xf32> to vector<8x8xf32>
    %65 = arith.mulf %60, %64 : vector<8x8xf32>
    %66 = arith.truncf %65 : vector<8x8xf32> to vector<8x8xbf16>
    %cst_22 = arith.constant dense<0.000000e+00> : vector<8x8xf32>
    %67 = tpu.matmul %66, %54, %cst_22 {dimension_numbers = #tpu.dot_dimension_numbers<[1], [0], [0], [1], [0, 0, 1, 1], [], []>} : vector<8x8xbf16>, vector<8x8xbf16>, vector<8x8xf32> -> vector<8x8xf32>
    %c0_23 = arith.constant 0 : index
    %c8 = arith.constant 8 : index
    %68 = vector.load %arg8[%c0_23, %c8] : memref<8x32xf32, #tpu.memory_space<vmem>>, vector<8x8xf32>
    tpu.vector_store %arg8[%c0_23, %c8], %67 {strides = array<i32>} : memref<8x32xf32, #tpu.memory_space<vmem>>, vector<8x8xf32>,
    %69 = vector.extract_strided_slice %28 {offsets = [0, 16], sizes = [8, 8], strides = [1, 1]} : vector<8x96xf32> to vector<8x8xf32>
    %70 = arith.truncf %69 : vector<8x8xf32> to vector<8x8xbf16>
    %71 = vector.extract_strided_slice %28 {offsets = [0, 48], sizes = [8, 8], strides = [1, 1]} : vector<8x96xf32> to vector<8x8xf32>
    %72 = arith.truncf %71 : vector<8x8xf32> to vector<8x8xbf16>
    %73 = vector.extract_strided_slice %28 {offsets = [0, 80], sizes = [8, 8], strides = [1, 1]} : vector<8x96xf32> to vector<8x8xf32>
    %74 = arith.truncf %73 : vector<8x8xf32> to vector<8x8xbf16>
    %cst_24 = arith.constant dense<0.000000e+00> : vector<8x8xf32>
    %75 = tpu.matmul %70, %72, %cst_24 {dimension_numbers = #tpu.dot_dimension_numbers<[1], [1], [0], [0], [0, 0, 1, 0], [], []>} : vector<8x8xbf16>, vector<8x8xbf16>, vector<8x8xf32> -> vector<8x8xf32>
    %cst_25 = arith.constant dense<0xFF800000> : vector<8xf32>
    %76 = vector.multi_reduction <maximumf>, %75, %cst_25 [1] : vector<8x8xf32> to vector<8xf32>
    %77 = vector.shape_cast %76 : vector<8xf32> to vector<8x1xf32>
    %78 = vector.broadcast %77 : vector<8x1xf32> to vector<8x8xf32>
    %79 = arith.subf %75, %78 : vector<8x8xf32>
    %80 = math.exp %79 : vector<8x8xf32>
    %cst_26 = arith.constant dense<0.000000e+00> : vector<8xf32>
    %81 = vector.multi_reduction <add>, %80, %cst_26 [1] : vector<8x8xf32> to vector<8xf32>
    %82 = vector.shape_cast %81 : vector<8xf32> to vector<8x1xf32>
    %83 = tpu.reciprocal %82 {approx = true} : vector<8x1xf32> -> vector<8x1xf32>
    %84 = vector.broadcast %83 : vector<8x1xf32> to vector<8x8xf32>
    %85 = arith.mulf %80, %84 : vector<8x8xf32>
    %86 = arith.truncf %85 : vector<8x8xf32> to vector<8x8xbf16>
    %cst_27 = arith.constant dense<0.000000e+00> : vector<8x8xf32>
    %87 = tpu.matmul %86, %74, %cst_27 {dimension_numbers = #tpu.dot_dimension_numbers<[1], [0], [0], [1], [0, 0, 1, 1], [], []>} : vector<8x8xbf16>, vector<8x8xbf16>, vector<8x8xf32> -> vector<8x8xf32>
    %c0_28 = arith.constant 0 : index
    %c16 = arith.constant 16 : index
    %88 = vector.load %arg8[%c0_28, %c16] : memref<8x32xf32, #tpu.memory_space<vmem>>, vector<8x8xf32>
    tpu.vector_store %arg8[%c0_28, %c16], %87 {strides = array<i32>} : memref<8x32xf32, #tpu.memory_space<vmem>>, vector<8x8xf32>,
    %89 = vector.extract_strided_slice %28 {offsets = [0, 24], sizes = [8, 8], strides = [1, 1]} : vector<8x96xf32> to vector<8x8xf32>
    %90 = arith.truncf %89 : vector<8x8xf32> to vector<8x8xbf16>
    %91 = vector.extract_strided_slice %28 {offsets = [0, 56], sizes = [8, 8], strides = [1, 1]} : vector<8x96xf32> to vector<8x8xf32>
    %92 = arith.truncf %91 : vector<8x8xf32> to vector<8x8xbf16>
    %93 = vector.extract_strided_slice %28 {offsets = [0, 88], sizes = [8, 8], strides = [1, 1]} : vector<8x96xf32> to vector<8x8xf32>
    %94 = arith.truncf %93 : vector<8x8xf32> to vector<8x8xbf16>
    %cst_29 = arith.constant dense<0.000000e+00> : vector<8x8xf32>
    %95 = tpu.matmul %90, %92, %cst_29 {dimension_numbers = #tpu.dot_dimension_numbers<[1], [1], [0], [0], [0, 0, 1, 0], [], []>} : vector<8x8xbf16>, vector<8x8xbf16>, vector<8x8xf32> -> vector<8x8xf32>
    %cst_30 = arith.constant dense<0xFF800000> : vector<8xf32>
    %96 = vector.multi_reduction <maximumf>, %95, %cst_30 [1] : vector<8x8xf32> to vector<8xf32>
    %97 = vector.shape_cast %96 : vector<8xf32> to vector<8x1xf32>
    %98 = vector.broadcast %97 : vector<8x1xf32> to vector<8x8xf32>
    %99 = arith.subf %95, %98 : vector<8x8xf32>
    %100 = math.exp %99 : vector<8x8xf32>
    %cst_31 = arith.constant dense<0.000000e+00> : vector<8xf32>
    %101 = vector.multi_reduction <add>, %100, %cst_31 [1] : vector<8x8xf32> to vector<8xf32>
    %102 = vector.shape_cast %101 : vector<8xf32> to vector<8x1xf32>
    %103 = tpu.reciprocal %102 {approx = true} : vector<8x1xf32> -> vector<8x1xf32>
    %104 = vector.broadcast %103 : vector<8x1xf32> to vector<8x8xf32>
    %105 = arith.mulf %100, %104 : vector<8x8xf32>
    %106 = arith.truncf %105 : vector<8x8xf32> to vector<8x8xbf16>
    %cst_32 = arith.constant dense<0.000000e+00> : vector<8x8xf32>
    %107 = tpu.matmul %106, %94, %cst_32 {dimension_numbers = #tpu.dot_dimension_numbers<[1], [0], [0], [1], [0, 0, 1, 1], [], []>} : vector<8x8xbf16>, vector<8x8xbf16>, vector<8x8xf32> -> vector<8x8xf32>
    %c0_33 = arith.constant 0 : index
    %c24 = arith.constant 24 : index
    %108 = vector.load %arg8[%c0_33, %c24] : memref<8x32xf32, #tpu.memory_space<vmem>>, vector<8x8xf32>
    tpu.vector_store %arg8[%c0_33, %c24], %107 {strides = array<i32>} : memref<8x32xf32, #tpu.memory_space<vmem>>, vector<8x8xf32>,
    %c0_34 = arith.constant 0 : index
    %c0_35 = arith.constant 0 : index
    %109 = vector.load %arg8[%c0_34, %c0_35] : memref<8x32xf32, #tpu.memory_space<vmem>>, vector<8x32xf32>
    %110 = arith.truncf %109 : vector<8x32xf32> to vector<8x32xbf16>
    %c0_36 = arith.constant 0 : index
    %c0_37 = arith.constant 0 : index
    %111 = vector.load %arg3[%c0_36, %c0_37] : memref<32x32xbf16, #tpu.memory_space<vmem>>, vector<32x32xbf16>
    %cst_38 = arith.constant dense<0.000000e+00> : vector<8x32xf32>
    %112 = tpu.matmul %110, %111, %cst_38 {dimension_numbers = #tpu.dot_dimension_numbers<[1], [0], [0], [1], [0, 0, 1, 1], [], []>} : vector<8x32xbf16>, vector<32x32xbf16>, vector<8x32xf32> -> vector<8x32xf32>
    %c0_39 = arith.constant 0 : index
    %c0_40 = arith.constant 0 : index
    %113 = vector.load %arg4[%c0_39, %c0_40] : memref<1x32xf32, #tpu.memory_space<vmem>>, vector<1x32xf32>
    %114 = vector.broadcast %113 : vector<1x32xf32> to vector<8x32xf32>
    %115 = arith.addf %112, %114 : vector<8x32xf32>
    %116 = arith.addf %1, %115 : vector<8x32xf32>
    %c0_41 = arith.constant 0 : index
    %c0_42 = arith.constant 0 : index
    %c0_43 = arith.constant 0 : index
    %117 = vector.load %arg7[%c0_41, %c0_42, %c0_43] : memref<1x8x32xf32, #tpu.memory_space<vmem>>, vector<1x8x32xf32>
    %118 = vector.shape_cast %117 : vector<1x8x32xf32> to vector<8x32xf32>
    %119 = vector.shape_cast %116 : vector<8x32xf32> to vector<1x8x32xf32>
    tpu.vector_store %arg7[%c0_41, %c0_42, %c0_43], %119 {strides = array<i32>} : memref<1x8x32xf32, #tpu.memory_space<vmem>>, vector<1x8x32xf32>,
    return
  }
  func.func @transform_0(%arg0: i32) -> (i32, i32, i32) {
    %c0_i32 = arith.constant 0 : i32
    %c0_i32_0 = arith.constant 0 : i32
    %c0_i32_1 = arith.constant 0 : i32
    return %arg0, %c0_i32, %c0_i32_0 : i32, i32, i32
  }
  func.func @transform_1(%arg0: i32) -> (i32, i32) {
    %c0_i32 = arith.constant 0 : i32
    %c0_i32_0 = arith.constant 0 : i32
    %c0_i32_1 = arith.constant 0 : i32
    return %c0_i32, %c0_i32_0 : i32, i32
  }
  func.func @transform_2(%arg0: i32) -> (i32, i32) {
    %c0_i32 = arith.constant 0 : i32
    %c0_i32_0 = arith.constant 0 : i32
    %c0_i32_1 = arith.constant 0 : i32
    return %c0_i32, %c0_i32_0 : i32, i32
  }
  func.func @transform_3(%arg0: i32) -> (i32, i32) {
    %c0_i32 = arith.constant 0 : i32
    %c0_i32_0 = arith.constant 0 : i32
    %c0_i32_1 = arith.constant 0 : i32
    return %c0_i32, %c0_i32_0 : i32, i32
  }
  func.func @transform_4(%arg0: i32) -> (i32, i32) {
    %c0_i32 = arith.constant 0 : i32
    %c0_i32_0 = arith.constant 0 : i32
    %c0_i32_1 = arith.constant 0 : i32
    return %c0_i32, %c0_i32_0 : i32, i32
  }
  func.func @transform_5(%arg0: i32) -> (i32, i32) {
    %c0_i32 = arith.constant 0 : i32
    %c0_i32_0 = arith.constant 0 : i32
    %c0_i32_1 = arith.constant 0 : i32
    return %c0_i32, %c0_i32_0 : i32, i32
  }
  func.func @transform_6(%arg0: i32) -> (i32, i32, i32) {
    %c0_i32 = arith.constant 0 : i32
    %c0_i32_0 = arith.constant 0 : i32
    %c0_i32_1 = arith.constant 0 : i32
    return %arg0, %c0_i32, %c0_i32_0 : i32, i32, i32
  }
}

module attributes {stable_mosaic.version = 11 : i64} {
  func.func @attn_kernel(%arg0: i32, %arg1: memref<1x8x32xf32, #tpu.memory_space<vmem>>, %arg2: memref<32x96xbf16, #tpu.memory_space<vmem>>, %arg3: memref<32x32xbf16, #tpu.memory_space<vmem>>, %arg4: memref<1x32xf32, #tpu.memory_space<vmem>>, %arg5: memref<1x32xf32, #tpu.memory_space<vmem>>, %arg6: memref<1x32xf32, #tpu.memory_space<vmem>>, %arg7: memref<1x8x32xf32, #tpu.memory_space<vmem>>, %arg8: memref<8x32xf32, #tpu.memory_space<vmem>>) attributes {dimension_semantics = [#tpu.dimension_semantics<parallel>], iteration_bounds = array<i64: 2>, scalar_prefetch = 0 : i64, scratch_operands = 1 : i64, tpu.core_type = #tpu.core_type<tc>, window_params = [{transform_indices = @transform_0, window_bounds = array<i64: 1, 8, 32>}, {pipeline_mode = #tpu.pipeline_mode<synchronous>, transform_indices = @transform_1, window_bounds = array<i64: 32, 96>}, {pipeline_mode = #tpu.pipeline_mode<synchronous>, transform_indices = @transform_2, window_bounds = array<i64: 32, 32>}, {pipeline_mode = #tpu.pipeline_mode<synchronous>, transform_indices = @transform_3, window_bounds = array<i64: 1, 32>}, {pipeline_mode = #tpu.pipeline_mode<synchronous>, transform_indices = @transform_4, window_bounds = array<i64: 1, 32>}, {pipeline_mode = #tpu.pipeline_mode<synchronous>, transform_indices = @transform_5, window_bounds = array<i64: 1, 32>}, {transform_indices = @transform_6, window_bounds = array<i64: 1, 8, 32>}]} {
    %c0 = arith.constant 0 : index
    %c0_0 = arith.constant 0 : index
    %c0_1 = arith.constant 0 : index
    %0 = vector.load %arg1[%c0, %c0_0, %c0_1] : memref<1x8x32xf32, #tpu.memory_space<vmem>>, vector<1x8x32xf32>
    %1 = vector.shape_cast %0 : vector<1x8x32xf32> to vector<8x32xf32>
    %c0_2 = arith.constant 0 : index
    %c0_3 = arith.constant 0 : index
    %2 = vector.load %arg5[%c0_2, %c0_3] : memref<1x32xf32, #tpu.memory_space<vmem>>, vector<1x32xf32>
    %c0_4 = arith.constant 0 : index
    %c0_5 = arith.constant 0 : index
    %3 = vector.load %arg6[%c0_4, %c0_5] : memref<1x32xf32, #tpu.memory_space<vmem>>, vector<1x32xf32>
    %cst = arith.constant dense<0.000000e+00> : vector<8xf32>
    %4 = vector.multi_reduction <add>, %1, %cst [1] : vector<8x32xf32> to vector<8xf32>
    %5 = vector.shape_cast %4 : vector<8xf32> to vector<8x1xf32>
    %cst_6 = arith.constant 3.200000e+01 : f32
    %6 = vector.broadcast %cst_6 : f32 to vector<8x1xf32>
    %7 = arith.divf %5, %6 : vector<8x1xf32>
    %8 = vector.broadcast %7 : vector<8x1xf32> to vector<8x32xf32>
    %9 = arith.subf %1, %8 : vector<8x32xf32>
    %10 = arith.mulf %9, %9 : vector<8x32xf32>
    %cst_7 = arith.constant dense<0.000000e+00> : vector<8xf32>
    %11 = vector.multi_reduction <add>, %10, %cst_7 [1] : vector<8x32xf32> to vector<8xf32>
    %12 = vector.shape_cast %11 : vector<8xf32> to vector<8x1xf32>
    %cst_8 = arith.constant 3.200000e+01 : f32
    %13 = vector.broadcast %cst_8 : f32 to vector<8x1xf32>
    %14 = arith.divf %12, %13 : vector<8x1xf32>
    %15 = vector.broadcast %7 : vector<8x1xf32> to vector<8x32xf32>
    %16 = arith.subf %1, %15 : vector<8x32xf32>
    %cst_9 = arith.constant 9.99999974E-6 : f32
    %17 = vector.broadcast %cst_9 : f32 to vector<8x1xf32>
    %18 = arith.addf %14, %17 : vector<8x1xf32>
    %19 = math.rsqrt %18 : vector<8x1xf32>
    %20 = vector.broadcast %19 : vector<8x1xf32> to vector<8x32xf32>
    %21 = arith.mulf %16, %20 : vector<8x32xf32>
    %22 = vector.broadcast %2 : vector<1x32xf32> to vector<8x32xf32>
    %23 = arith.mulf %21, %22 : vector<8x32xf32>
    %24 = vector.broadcast %3 : vector<1x32xf32> to vector<8x32xf32>
    %25 = arith.addf %23, %24 : vector<8x32xf32>
    %26 = arith.truncf %25 : vector<8x32xf32> to vector<8x32xbf16>
    %c0_10 = arith.constant 0 : index
    %c0_11 = arith.constant 0 : index
    %27 = vector.load %arg2[%c0_10, %c0_11] : memref<32x96xbf16, #tpu.memory_space<vmem>>, vector<32x96xbf16>
    %cst_12 = arith.constant dense<0.000000e+00> : vector<8x96xf32>
    %28 = tpu.matmul %26, %27, %cst_12 {dimension_numbers = #tpu.dot_dimension_numbers<[1], [0], [0], [1], [0, 0, 1, 1], [], []>} : vector<8x32xbf16>, vector<32x96xbf16>, vector<8x96xf32> -> vector<8x96xf32>
    %29 = vector.extract_strided_slice %28 {offsets = [0, 0], sizes = [8, 8], strides = [1, 1]} : vector<8x96xf32> to vector<8x8xf32>
    %30 = arith.truncf %29 : vector<8x8xf32> to vector<8x8xbf16>
    %31 = vector.extract_strided_slice %28 {offsets = [0, 32], sizes = [8, 8], strides = [1, 1]} : vector<8x96xf32> to vector<8x8xf32>
    %32 = arith.truncf %31 : vector<8x8xf32> to vector<8x8xbf16>
    %33 = vector.extract_strided_slice %28 {offsets = [0, 64], sizes = [8, 8], strides = [1, 1]} : vector<8x96xf32> to vector<8x8xf32>
    %34 = arith.truncf %33 : vector<8x8xf32> to vector<8x8xbf16>
    %cst_13 = arith.constant dense<0.000000e+00> : vector<8x8xf32>
    %35 = tpu.matmul %30, %32, %cst_13 {dimension_numbers = #tpu.dot_dimension_numbers<[1], [1], [0], [0], [0, 0, 1, 0], [], []>} : vector<8x8xbf16>, vector<8x8xbf16>, vector<8x8xf32> -> vector<8x8xf32>
    %cst_14 = arith.constant dense<0xFF800000> : vector<8xf32>
    %36 = vector.multi_reduction <maximumf>, %35, %cst_14 [1] : vector<8x8xf32> to vector<8xf32>
    %37 = vector.shape_cast %36 : vector<8xf32> to vector<8x1xf32>
    %38 = vector.broadcast %37 : vector<8x1xf32> to vector<8x8xf32>
    %39 = arith.subf %35, %38 : vector<8x8xf32>
    %40 = math.exp %39 : vector<8x8xf32>
    %cst_15 = arith.constant dense<0.000000e+00> : vector<8xf32>
    %41 = vector.multi_reduction <add>, %40, %cst_15 [1] : vector<8x8xf32> to vector<8xf32>
    %42 = vector.shape_cast %41 : vector<8xf32> to vector<8x1xf32>
    %43 = tpu.reciprocal %42 {approx = true} : vector<8x1xf32> -> vector<8x1xf32>
    %44 = vector.broadcast %43 : vector<8x1xf32> to vector<8x8xf32>
    %45 = arith.mulf %40, %44 : vector<8x8xf32>
    %46 = arith.truncf %45 : vector<8x8xf32> to vector<8x8xbf16>
    %cst_16 = arith.constant dense<0.000000e+00> : vector<8x8xf32>
    %47 = tpu.matmul %46, %34, %cst_16 {dimension_numbers = #tpu.dot_dimension_numbers<[1], [0], [0], [1], [0, 0, 1, 1], [], []>} : vector<8x8xbf16>, vector<8x8xbf16>, vector<8x8xf32> -> vector<8x8xf32>
    %c0_17 = arith.constant 0 : index
    %c0_18 = arith.constant 0 : index
    %48 = vector.load %arg8[%c0_17, %c0_18] : memref<8x32xf32, #tpu.memory_space<vmem>>, vector<8x8xf32>
    tpu.vector_store %arg8[%c0_17, %c0_18], %47 {strides = array<i32>} : memref<8x32xf32, #tpu.memory_space<vmem>>, vector<8x8xf32>,
    %49 = vector.extract_strided_slice %28 {offsets = [0, 8], sizes = [8, 8], strides = [1, 1]} : vector<8x96xf32> to vector<8x8xf32>
    %50 = arith.truncf %49 : vector<8x8xf32> to vector<8x8xbf16>
    %51 = vector.extract_strided_slice %28 {offsets = [0, 40], sizes = [8, 8], strides = [1, 1]} : vector<8x96xf32> to vector<8x8xf32>
    %52 = arith.truncf %51 : vector<8x8xf32> to vector<8x8xbf16>
    %53 = vector.extract_strided_slice %28 {offsets = [0, 72], sizes = [8, 8], strides = [1, 1]} : vector<8x96xf32> to vector<8x8xf32>
    %54 = arith.truncf %53 : vector<8x8xf32> to vector<8x8xbf16>
    %cst_19 = arith.constant dense<0.000000e+00> : vector<8x8xf32>
    %55 = tpu.matmul %50, %52, %cst_19 {dimension_numbers = #tpu.dot_dimension_numbers<[1], [1], [0], [0], [0, 0, 1, 0], [], []>} : vector<8x8xbf16>, vector<8x8xbf16>, vector<8x8xf32> -> vector<8x8xf32>
    %cst_20 = arith.constant dense<0xFF800000> : vector<8xf32>
    %56 = vector.multi_reduction <maximumf>, %55, %cst_20 [1] : vector<8x8xf32> to vector<8xf32>
    %57 = vector.shape_cast %56 : vector<8xf32> to vector<8x1xf32>
    %58 = vector.broadcast %57 : vector<8x1xf32> to vector<8x8xf32>
    %59 = arith.subf %55, %58 : vector<8x8xf32>
    %60 = math.exp %59 : vector<8x8xf32>
    %cst_21 = arith.constant dense<0.000000e+00> : vector<8xf32>
    %61 = vector.multi_reduction <add>, %60, %cst_21 [1] : vector<8x8xf32> to vector<8xf32>
    %62 = vector.shape_cast %61 : vector<8xf32> to vector<8x1xf32>
    %63 = tpu.reciprocal %62 {approx = true} : vector<8x1xf32> -> vector<8x1xf32>
    %64 = vector.broadcast %63 : vector<8x1xf32> to vector<8x8xf32>
    %65 = arith.mulf %60, %64 : vector<8x8xf32>
    %66 = arith.truncf %65 : vector<8x8xf32> to vector<8x8xbf16>
    %cst_22 = arith.constant dense<0.000000e+00> : vector<8x8xf32>
    %67 = tpu.matmul %66, %54, %cst_22 {dimension_numbers = #tpu.dot_dimension_numbers<[1], [0], [0], [1], [0, 0, 1, 1], [], []>} : vector<8x8xbf16>, vector<8x8xbf16>, vector<8x8xf32> -> vector<8x8xf32>
    %c0_23 = arith.constant 0 : index
    %c8 = arith.constant 8 : index
    %68 = vector.load %arg8[%c0_23, %c8] : memref<8x32xf32, #tpu.memory_space<vmem>>, vector<8x8xf32>
    tpu.vector_store %arg8[%c0_23, %c8], %67 {strides = array<i32>} : memref<8x32xf32, #tpu.memory_space<vmem>>, vector<8x8xf32>,
    %69 = vector.extract_strided_slice %28 {offsets = [0, 16], sizes = [8, 8], strides = [1, 1]} : vector<8x96xf32> to vector<8x8xf32>
    %70 = arith.truncf %69 : vector<8x8xf32> to vector<8x8xbf16>
    %71 = vector.extract_strided_slice %28 {offsets = [0, 48], sizes = [8, 8], strides = [1, 1]} : vector<8x96xf32> to vector<8x8xf32>
    %72 = arith.truncf %71 : vector<8x8xf32> to vector<8x8xbf16>
    %73 = vector.extract_strided_slice %28 {offsets = [0, 80], sizes = [8, 8], strides = [1, 1]} : vector<8x96xf32> to vector<8x8xf32>
    %74 = arith.truncf %73 : vector<8x8xf32> to vector<8x8xbf16>
    %cst_24 = arith.constant dense<0.000000e+00> : vector<8x8xf32>
    %75 = tpu.matmul %70, %72, %cst_24 {dimension_numbers = #tpu.dot_dimension_numbers<[1], [1], [0], [0], [0, 0, 1, 0], [], []>} : vector<8x8xbf16>, vector<8x8xbf16>, vector<8x8xf32> -> vector<8x8xf32>
    %cst_25 = arith.constant dense<0xFF800000> : vector<8xf32>
    %76 = vector.multi_reduction <maximumf>, %75, %cst_25 [1] : vector<8x8xf32> to vector<8xf32>
    %77 = vector.shape_cast %76 : vector<8xf32> to vector<8x1xf32>
    %78 = vector.broadcast %77 : vector<8x1xf32> to vector<8x8xf32>
    %79 = arith.subf %75, %78 : vector<8x8xf32>
    %80 = math.exp %79 : vector<8x8xf32>
    %cst_26 = arith.constant dense<0.000000e+00> : vector<8xf32>
    %81 = vector.multi_reduction <add>, %80, %cst_26 [1] : vector<8x8xf32> to vector<8xf32>
    %82 = vector.shape_cast %81 : vector<8xf32> to vector<8x1xf32>
    %83 = tpu.reciprocal %82 {approx = true} : vector<8x1xf32> -> vector<8x1xf32>
    %84 = vector.broadcast %83 : vector<8x1xf32> to vector<8x8xf32>
    %85 = arith.mulf %80, %84 : vector<8x8xf32>
    %86 = arith.truncf %85 : vector<8x8xf32> to vector<8x8xbf16>
    %cst_27 = arith.constant dense<0.000000e+00> : vector<8x8xf32>
    %87 = tpu.matmul %86, %74, %cst_27 {dimension_numbers = #tpu.dot_dimension_numbers<[1], [0], [0], [1], [0, 0, 1, 1], [], []>} : vector<8x8xbf16>, vector<8x8xbf16>, vector<8x8xf32> -> vector<8x8xf32>
    %c0_28 = arith.constant 0 : index
    %c16 = arith.constant 16 : index
    %88 = vector.load %arg8[%c0_28, %c16] : memref<8x32xf32, #tpu.memory_space<vmem>>, vector<8x8xf32>
    tpu.vector_store %arg8[%c0_28, %c16], %87 {strides = array<i32>} : memref<8x32xf32, #tpu.memory_space<vmem>>, vector<8x8xf32>,
    %89 = vector.extract_strided_slice %28 {offsets = [0, 24], sizes = [8, 8], strides = [1, 1]} : vector<8x96xf32> to vector<8x8xf32>
    %90 = arith.truncf %89 : vector<8x8xf32> to vector<8x8xbf16>
    %91 = vector.extract_strided_slice %28 {offsets = [0, 56], sizes = [8, 8], strides = [1, 1]} : vector<8x96xf32> to vector<8x8xf32>
    %92 = arith.truncf %91 : vector<8x8xf32> to vector<8x8xbf16>
    %93 = vector.extract_strided_slice %28 {offsets = [0, 88], sizes = [8, 8], strides = [1, 1]} : vector<8x96xf32> to vector<8x8xf32>
    %94 = arith.truncf %93 : vector<8x8xf32> to vector<8x8xbf16>
    %cst_29 = arith.constant dense<0.000000e+00> : vector<8x8xf32>
    %95 = tpu.matmul %90, %92, %cst_29 {dimension_numbers = #tpu.dot_dimension_numbers<[1], [1], [0], [0], [0, 0, 1, 0], [], []>} : vector<8x8xbf16>, vector<8x8xbf16>, vector<8x8xf32> -> vector<8x8xf32>
    %cst_30 = arith.constant dense<0xFF800000> : vector<8xf32>
    %96 = vector.multi_reduction <maximumf>, %95, %cst_30 [1] : vector<8x8xf32> to vector<8xf32>
    %97 = vector.shape_cast %96 : vector<8xf32> to vector<8x1xf32>
    %98 = vector.broadcast %97 : vector<8x1xf32> to vector<8x8xf32>
    %99 = arith.subf %95, %98 : vector<8x8xf32>
    %100 = math.exp %99 : vector<8x8xf32>
    %cst_31 = arith.constant dense<0.000000e+00> : vector<8xf32>
    %101 = vector.multi_reduction <add>, %100, %cst_31 [1] : vector<8x8xf32> to vector<8xf32>
    %102 = vector.shape_cast %101 : vector<8xf32> to vector<8x1xf32>
    %103 = tpu.reciprocal %102 {approx = true} : vector<8x1xf32> -> vector<8x1xf32>
    %104 = vector.broadcast %103 : vector<8x1xf32> to vector<8x8xf32>
    %105 = arith.mulf %100, %104 : vector<8x8xf32>
    %106 = arith.truncf %105 : vector<8x8xf32> to vector<8x8xbf16>
    %cst_32 = arith.constant dense<0.000000e+00> : vector<8x8xf32>
    %107 = tpu.matmul %106, %94, %cst_32 {dimension_numbers = #tpu.dot_dimension_numbers<[1], [0], [0], [1], [0, 0, 1, 1], [], []>} : vector<8x8xbf16>, vector<8x8xbf16>, vector<8x8xf32> -> vector<8x8xf32>
    %c0_33 = arith.constant 0 : index
    %c24 = arith.constant 24 : index
    %108 = vector.load %arg8[%c0_33, %c24] : memref<8x32xf32, #tpu.memory_space<vmem>>, vector<8x8xf32>
    tpu.vector_store %arg8[%c0_33, %c24], %107 {strides = array<i32>} : memref<8x32xf32, #tpu.memory_space<vmem>>, vector<8x8xf32>,
    %c0_34 = arith.constant 0 : index
    %c0_35 = arith.constant 0 : index
    %109 = vector.load %arg8[%c0_34, %c0_35] : memref<8x32xf32, #tpu.memory_space<vmem>>, vector<8x32xf32>
    %110 = arith.truncf %109 : vector<8x32xf32> to vector<8x32xbf16>
    %c0_36 = arith.constant 0 : index
    %c0_37 = arith.constant 0 : index
    %111 = vector.load %arg3[%c0_36, %c0_37] : memref<32x32xbf16, #tpu.memory_space<vmem>>, vector<32x32xbf16>
    %cst_38 = arith.constant dense<0.000000e+00> : vector<8x32xf32>
    %112 = tpu.matmul %110, %111, %cst_38 {dimension_numbers = #tpu.dot_dimension_numbers<[1], [0], [0], [1], [0, 0, 1, 1], [], []>} : vector<8x32xbf16>, vector<32x32xbf16>, vector<8x32xf32> -> vector<8x32xf32>
    %c0_39 = arith.constant 0 : index
    %c0_40 = arith.constant 0 : index
    %113 = vector.load %arg4[%c0_39, %c0_40] : memref<1x32xf32, #tpu.memory_space<vmem>>, vector<1x32xf32>
    %114 = vector.broadcast %113 : vector<1x32xf32> to vector<8x32xf32>
    %115 = arith.addf %112, %114 : vector<8x32xf32>
    %116 = arith.addf %1, %115 : vector<8x32xf32>
    %c0_41 = arith.constant 0 : index
    %c0_42 = arith.constant 0 : index
    %c0_43 = arith.constant 0 : index
    %117 = vector.load %arg7[%c0_41, %c0_42, %c0_43] : memref<1x8x32xf32, #tpu.memory_space<vmem>>, vector<1x8x32xf32>
    %118 = vector.shape_cast %117 : vector<1x8x32xf32> to vector<8x32xf32>
    %119 = vector.shape_cast %116 : vector<8x32xf32> to vector<1x8x32xf32>
    tpu.vector_store %arg7[%c0_41, %c0_42, %c0_43], %119 {strides = array<i32>} : memref<1x8x32xf32, #tpu.memory_space<vmem>>, vector<1x8x32xf32>,
    return
  }
  func.func @transform_0(%arg0: i32) -> (i32, i32, i32) {
    %c0_i32 = arith.constant 0 : i32
    %c0_i32_0 = arith.constant 0 : i32
    %c0_i32_1 = arith.constant 0 : i32
    return %arg0, %c0_i32, %c0_i32_0 : i32, i32, i32
  }
  func.func @transform_1(%arg0: i32) -> (i32, i32) {
    %c0_i32 = arith.constant 0 : i32
    %c0_i32_0 = arith.constant 0 : i32
    %c0_i32_1 = arith.constant 0 : i32
    return %c0_i32, %c0_i32_0 : i32, i32
  }
  func.func @transform_2(%arg0: i32) -> (i32, i32) {
    %c0_i32 = arith.constant 0 : i32
    %c0_i32_0 = arith.constant 0 : i32
    %c0_i32_1 = arith.constant 0 : i32
    return %c0_i32, %c0_i32_0 : i32, i32
  }
  func.func @transform_3(%arg0: i32) -> (i32, i32) {
    %c0_i32 = arith.constant 0 : i32
    %c0_i32_0 = arith.constant 0 : i32
    %c0_i32_1 = arith.constant 0 : i32
    return %c0_i32, %c0_i32_0 : i32, i32
  }
  func.func @transform_4(%arg0: i32) -> (i32, i32) {
    %c0_i32 = arith.constant 0 : i32
    %c0_i32_0 = arith.constant 0 : i32
    %c0_i32_1 = arith.constant 0 : i32
    return %c0_i32, %c0_i32_0 : i32, i32
  }
  func.func @transform_5(%arg0: i32) -> (i32, i32) {
    %c0_i32 = arith.constant 0 : i32
    %c0_i32_0 = arith.constant 0 : i32
    %c0_i32_1 = arith.constant 0 : i32
    return %c0_i32, %c0_i32_0 : i32, i32
  }
  func.func @transform_6(%arg0: i32) -> (i32, i32, i32) {
    %c0_i32 = arith.constant 0 : i32
    %c0_i32_0 = arith.constant 0 : i32
    %c0_i32_1 = arith.constant 0 : i32
    return %arg0, %c0_i32, %c0_i32_0 : i32, i32, i32
  }
}

</mosaic_0001>

<llo_original>
// kernel: tpu_custom_call.1
$region0: #{tpu_custom_call.1}
  #allocation0 [shape = 'u32[]', space=smem, size = 0x4, offset = 0x4, fixed_abs, tag = 'smem constant byte address 0x4 - core index']
  #allocation1 [shape = 'u32[72,128]{1,0:T(1,128)}', space=vmem, size = 0x9000, scoped, tag = 'internal scratch']
  #allocation2 [shape = 'f32[8,32]{1,0:T(8,128)}', space=vmem, size = 0x1000, scoped, tag = 'scratch operand']
  %s0 = inlined_call_operand.hbm [shape: f32[2,8,32], index: 0, kind: input, shape index: {}]
  %s1 = inlined_call_operand.hbm [shape: bf16[32,96], index: 1, kind: input, shape index: {}]
  %s2 = inlined_call_operand.hbm [shape: bf16[32,32], index: 2, kind: input, shape index: {}]
  %s3 = inlined_call_operand.vmem [shape: f32[1,32], index: 3, kind: input, shape index: {}]
  %s4 = inlined_call_operand.vmem [shape: f32[1,32], index: 4, kind: input, shape index: {}]
  %s5 = inlined_call_operand.vmem [shape: f32[1,32], index: 5, kind: input, shape index: {}]
  %s6 = inlined_call_operand.hbm [shape: f32[2,8,32], index: 6, kind: output, shape index: {}]
  %s7 = sld [smem:[#allocation0]]
  $region69: #{tpu_custom_call.1} parent=0
    _
  %s9 = ssub.s32 1, %s7
  %s10 = scalar_select 0, %s9, %s7
  $region1: #{tpu_custom_call.1} parent=0
    #allocation3 [shape = 'u8[8192]{0}', space=vmem, size = 0x2000, scoped, tag = 'input window, operand 0']
    #allocation4 [shape = 's32[2]{0}', space=sflag, size = 0x8, scoped, tag = 'scoped memory for tpu_custom_call.1']
    #allocation5 [shape = 's32[2]{0}', space=sflag, size = 0x8, scoped, tag = 'scoped memory for tpu_custom_call.1']
    #allocation6 [shape = 'u8[8192]{0}', space=vmem, size = 0x2000, scoped, tag = 'input window, operand 1, single buffered']
    #allocation7 [shape = 's32[1]{0}', space=sflag, size = 0x4, scoped, tag = 'scoped memory for tpu_custom_call.1']
    #allocation8 [shape = 'u8[8192]{0}', space=vmem, size = 0x2000, scoped, tag = 'input window, operand 2, single buffered']
    #allocation9 [shape = 'u8[8192]{0}', space=vmem, size = 0x2000, scoped, tag = 'output window, operand 0']
    %11 = vsyncpa [#allocation4], 0
    %s12 = scalar_lea.sflag [#allocation4], 1
    %13 = vsyncpa %s12, 0
    %14 = vsyncpa [#allocation7], 0
    %15 = vsyncpa [#allocation5], 0
    %s16 = scalar_lea.sflag [#allocation5], 1
    %17 = vsyncpa %s16, 0
    loop: start=0, step=1, limit=4
    $region2: #{tpu_custom_call.1} parent=1 // loop_pre_header
      _
    $region3: #{tpu_custom_call.1} parent=1 // loop_header
      %s19 = sphi 0, %s23
      %p20 = scmp.ge.s32.totalorder %s19, 4
      %s29 = sphi 0, %s31
      %s32 = sphi 0, %s29
      %s33 = sphi 0, %s32
      %s49 = sphi 0, %s33
      %s53 = sphi 0, %s53
      %s55 = sphi 0, %s53
      %s56 = sphi 0, %s55
      %s70 = sphi 0, %s56
      %s74 = sphi 0, %s74
      %s76 = sphi 0, %s74
      %s77 = sphi 0, %s76
      %s91 = sphi 0, %s77
      %s95 = sphi 0, %s95
      %s97 = sphi 0, %s95
      %s98 = sphi 0, %s97
      %s112 = sphi 0, %s98
      %s116 = sphi 0, %s116
      %s118 = sphi 0, %s116
      %s119 = sphi 0, %s118
      %s133 = sphi 0, %s119
      %s137 = sphi 0, %s137
      %s139 = sphi 0, %s137
      %s140 = sphi 0, %s139
      %s154 = sphi 0, %s140
      %s160 = sphi 0, %s162
      %s163 = sphi 0, %s160
      %s164 = sphi 0, %s163
      %s180 = sphi 0, %s164
    $region4: #{tpu_custom_call.1} parent=1 // loop_header_branch
      %22 = sbr.rel (%p20) target = $region8
    $region5: #{tpu_custom_call.1} parent=1 // loop_body
      %s24 = ssub.s32 %s19, 1
      %s25 = ssub.s32 %s19, 2
      %s26 = sadd.s32 %s19, 1
      %s27 = ssub.s32 %s19, %s26
      %p28 = scmp.eq.s32.totalorder %s27, 0
      %s30 = sadd.s32 %s29, 1
      %s31 = scalar_select %p28, %s29, %s30
      %p34 = pneg %p28
      %p35 = scmp.eq.s32.totalorder %s19, 1
      %p36 = por %p34, %p35
      %p37 = scmp.ne.s32.totalorder %s29, %s32
      %p38 = scmp.eq.s32.totalorder %s19, 0
      %p39 = por %p37, %p38
      %p40 = scmp.ne.s32.totalorder %s29, %s32
      %p41 = scmp.eq.s32.totalorder %s24, 1
      %p42 = por %p40, %p41
      %p43 = scmp.ne.s32.totalorder %s32, %s33
      %p44 = scmp.eq.s32.totalorder %s24, 0
      %p45 = por %p43, %p44
      %p46 = scmp.ne.s32.totalorder %s32, %s33
      %p47 = scmp.eq.s32.totalorder %s25, 1
      %p48 = por %p46, %p47
      %p50 = scmp.ne.s32.totalorder %s33, %s49
      %p51 = scmp.eq.s32.totalorder %s25, 0
      %p52 = por %p50, %p51
      %s54 = sadd.s32 %s53, 1
      %p57 = scmp.eq.s32.totalorder %s19, 1
      %p58 = scmp.ne.s32.totalorder %s53, %s55
      %p59 = scmp.eq.s32.totalorder %s19, 0
      %p60 = por %p58, %p59
      %p61 = scmp.ne.s32.totalorder %s53, %s55
      %p62 = scmp.eq.s32.totalorder %s24, 1
      %p63 = por %p61, %p62
      %p64 = scmp.ne.s32.totalorder %s55, %s56
      %p65 = scmp.eq.s32.totalorder %s24, 0
      %p66 = por %p64, %p65
      %p67 = scmp.ne.s32.totalorder %s55, %s56
      %p68 = scmp.eq.s32.totalorder %s25, 1
      %p69 = por %p67, %p68
      %p71 = scmp.ne.s32.totalorder %s56, %s70
      %p72 = scmp.eq.s32.totalorder %s25, 0
      %p73 = por %p71, %p72
      %s75 = sadd.s32 %s74, 1
      %p78 = scmp.eq.s32.totalorder %s19, 1
      %p79 = scmp.ne.s32.totalorder %s74, %s76
      %p80 = scmp.eq.s32.totalorder %s19, 0
      %p81 = por %p79, %p80
      %p82 = scmp.ne.s32.totalorder %s74, %s76
      %p83 = scmp.eq.s32.totalorder %s24, 1
      %p84 = por %p82, %p83
      %p85 = scmp.ne.s32.totalorder %s76, %s77
      %p86 = scmp.eq.s32.totalorder %s24, 0
      %p87 = por %p85, %p86
      %p88 = scmp.ne.s32.totalorder %s76, %s77
      %p89 = scmp.eq.s32.totalorder %s25, 1
      %p90 = por %p88, %p89
      %p92 = scmp.ne.s32.totalorder %s77, %s91
      %p93 = scmp.eq.s32.totalorder %s25, 0
      %p94 = por %p92, %p93
      %s96 = sadd.s32 %s95, 1
      %p99 = scmp.eq.s32.totalorder %s19, 1
      %p100 = scmp.ne.s32.totalorder %s95, %s97
      %p101 = scmp.eq.s32.totalorder %s19, 0
      %p102 = por %p100, %p101
      %p103 = scmp.ne.s32.totalorder %s95, %s97
      %p104 = scmp.eq.s32.totalorder %s24, 1
      %p105 = por %p103, %p104
      %p106 = scmp.ne.s32.totalorder %s97, %s98
      %p107 = scmp.eq.s32.totalorder %s24, 0
      %p108 = por %p106, %p107
      %p109 = scmp.ne.s32.totalorder %s97, %s98
      %p110 = scmp.eq.s32.totalorder %s25, 1
      %p111 = por %p109, %p110
      %p113 = scmp.ne.s32.totalorder %s98, %s112
      %p114 = scmp.eq.s32.totalorder %s25, 0
      %p115 = por %p113, %p114
      %s117 = sadd.s32 %s116, 1
      %p120 = scmp.eq.s32.totalorder %s19, 1
      %p121 = scmp.ne.s32.totalorder %s116, %s118
      %p122 = scmp.eq.s32.totalorder %s19, 0
      %p123 = por %p121, %p122
      %p124 = scmp.ne.s32.totalorder %s116, %s118
      %p125 = scmp.eq.s32.totalorder %s24, 1
      %p126 = por %p124, %p125
      %p127 = scmp.ne.s32.totalorder %s118, %s119
      %p128 = scmp.eq.s32.totalorder %s24, 0
      %p129 = por %p127, %p128
      %p130 = scmp.ne.s32.totalorder %s118, %s119
      %p131 = scmp.eq.s32.totalorder %s25, 1
      %p132 = por %p130, %p131
      %p134 = scmp.ne.s32.totalorder %s119, %s133
      %p135 = scmp.eq.s32.totalorder %s25, 0
      %p136 = por %p134, %p135
      %s138 = sadd.s32 %s137, 1
      %p141 = scmp.eq.s32.totalorder %s19, 1
      %p142 = scmp.ne.s32.totalorder %s137, %s139
      %p143 = scmp.eq.s32.totalorder %s19, 0
      %p144 = por %p142, %p143
      %p145 = scmp.ne.s32.totalorder %s137, %s139
      %p146 = scmp.eq.s32.totalorder %s24, 1
      %p147 = por %p145, %p146
      %p148 = scmp.ne.s32.totalorder %s139, %s140
      %p149 = scmp.eq.s32.totalorder %s24, 0
      %p150 = por %p148, %p149
      %p151 = scmp.ne.s32.totalorder %s139, %s140
      %p152 = scmp.eq.s32.totalorder %s25, 1
      %p153 = por %p151, %p152
      %p155 = scmp.ne.s32.totalorder %s140, %s154
      %p156 = scmp.eq.s32.totalorder %s25, 0
      %p157 = por %p155, %p156
      %s158 = ssub.s32 %s19, %s26
      %p159 = scmp.eq.s32.totalorder %s158, 0
      %s161 = sadd.s32 %s160, 1
      %s162 = scalar_select %p159, %s160, %s161
      %p165 = pneg %p159
      %p166 = scmp.eq.s32.totalorder %s19, 1
      %p167 = por %p165, %p166
      %p168 = scmp.ne.s32.totalorder %s160, %s163
      %p169 = scmp.eq.s32.totalorder %s19, 0
      %p170 = por %p168, %p169
      %p171 = scmp.ne.s32.totalorder %s160, %s163
      %p172 = scmp.eq.s32.totalorder %s24, 1
      %p173 = por %p171, %p172
      %p174 = scmp.ne.s32.totalorder %s163, %s164
      %p175 = scmp.eq.s32.totalorder %s24, 0
      %p176 = por %p174, %p175
      %p177 = scmp.ne.s32.totalorder %s163, %s164
      %p178 = scmp.eq.s32.totalorder %s25, 1
      %p179 = por %p177, %p178
      %p181 = scmp.ne.s32.totalorder %s164, %s180
      %p182 = scmp.eq.s32.totalorder %s25, 0
      %p183 = por %p181, %p182
      %p184 = scmp.le.s32.totalorder 1, %s19
      %p185 = scmp.lt.s32.totalorder %s19, 3
      %p186 = pnand %p184, %p185
      %p187 = pneg %p186
      // Predicated region
      $region9: #{tpu_custom_call.1} parent=5 // pred_check
        _
      $region10: #{tpu_custom_call.1} parent=5 // pred_check_branch
        %189 = sbr.rel (%p186) target = $region12
      $region11: #{tpu_custom_call.1} parent=5 // pred_region
        %s190 = ssub.s32 %s19, 1
        // Predicated region
        $region13: #{tpu_custom_call.1} parent=11 // pred_check
          %p191 = pneg %p66
        $region14: #{tpu_custom_call.1} parent=11 // pred_check_branch
          %193 = sbr.rel (%p191) target = $region16
        $region15: #{tpu_custom_call.1} parent=11 // pred_region
          %195 = vsyncadd [#allocation7], 0
          %s196 = sshll.u32 %s1, 4
          %s197 = int_to_ptr.hbm [resolvable:$true] %s196
          %s198 = sshll.u32 [#allocation6], 4
          %s199 = int_to_ptr.vmem [resolvable:$true] %s198
          %204 = dma.hbm_to_vmem [thread:$0]  %s197, 256, %s199, [#allocation7], 64, 64, 4
        $region16: #{tpu_custom_call.1} parent=11 // pred_fallthru
          _
        // Predicated region
        $region17: #{tpu_custom_call.1} parent=11 // pred_check
          %p205 = pneg %p87
        $region18: #{tpu_custom_call.1} parent=11 // pred_check_branch
          %207 = sbr.rel (%p205) target = $region20
        $region19: #{tpu_custom_call.1} parent=11 // pred_region
          %209 = vsyncadd [#allocation7], 0
          %s210 = sshll.u32 %s2, 4
          %s211 = int_to_ptr.hbm [resolvable:$true] %s210
          %s212 = sshll.u32 [#allocation8], 4
          %s213 = int_to_ptr.vmem [resolvable:$true] %s212
          %218 = dma.hbm_to_vmem [thread:$0]  %s211, 256, %s213, [#allocation7], 64, 64, 4
        $region20: #{tpu_custom_call.1} parent=11 // pred_fallthru
          _
        // Predicated region
        $region21: #{tpu_custom_call.1} parent=11 // pred_check
          %p219 = pneg %p108
        $region22: #{tpu_custom_call.1} parent=11 // pred_check_branch
          %221 = sbr.rel (%p219) target = $region24
        $region23: #{tpu_custom_call.1} parent=11 // pred_region
          _
        $region24: #{tpu_custom_call.1} parent=11 // pred_fallthru
          _
        // Predicated region
        $region25: #{tpu_custom_call.1} parent=11 // pred_check
          %p222 = pneg %p129
        $region26: #{tpu_custom_call.1} parent=11 // pred_check_branch
          %224 = sbr.rel (%p222) target = $region28
        $region27: #{tpu_custom_call.1} parent=11 // pred_region
          _
        $region28: #{tpu_custom_call.1} parent=11 // pred_fallthru
          _
        // Predicated region
        $region29: #{tpu_custom_call.1} parent=11 // pred_check
          %p225 = pneg %p150
        $region30: #{tpu_custom_call.1} parent=11 // pred_check_branch
          %227 = sbr.rel (%p225) target = $region32
        $region31: #{tpu_custom_call.1} parent=11 // pred_region
          _
        $region32: #{tpu_custom_call.1} parent=11 // pred_fallthru
          _
      $region12: #{tpu_custom_call.1} parent=5 // pred_fallthru
        _
      %p228 = scmp.lt.s32.totalorder %s19, 2
      // Predicated region
      $region33: #{tpu_custom_call.1} parent=5 // pred_check
        %p229 = pneg %p228
      $region34: #{tpu_custom_call.1} parent=5 // pred_check_branch
        %231 = sbr.rel (%p229) target = $region36
      $region35: #{tpu_custom_call.1} parent=5 // pred_region
        // Predicated region
        $region37: #{tpu_custom_call.1} parent=35 // pred_check
          %p232 = pneg %p39
        $region38: #{tpu_custom_call.1} parent=35 // pred_check_branch
          %234 = sbr.rel (%p232) target = $region40
        $region39: #{tpu_custom_call.1} parent=35 // pred_region
          %s235 = sand.u32 %s29, 1
          %s236 = scalar_lea.sflag [#allocation4], %s235
          %s237 = sand.u32 %s29, 1
          %s238 = smul.addr %s237, 8
          %s239 = scalar_lea.vmem [#allocation3], %s238
          %241 = vsyncadd %s236, 0
          %s242 = smul.addr %s19, 8
          %s243 = scalar_lea.hbm %s0, %s242
          %s245 = sshll.u32 %s243, 4
          %s246 = int_to_ptr.hbm [resolvable:$true] %s245
          %s247 = sshll.u32 %s239, 4
          %s248 = int_to_ptr.vmem [resolvable:$true] %s247
          %250 = dma.hbm_to_vmem [thread:$0]  %s246, 128, %s248, %s236
        $region40: #{tpu_custom_call.1} parent=35 // pred_fallthru
          _
      $region36: #{tpu_custom_call.1} parent=5 // pred_fallthru
        _
      %p251 = scmp.le.s32.totalorder 1, %s19
      %p252 = scmp.lt.s32.totalorder %s19, 3
      %p253 = pnand %p251, %p252
      %p254 = pneg %p253
      // Predicated region
      $region41: #{tpu_custom_call.1} parent=5 // pred_check
        _
      $region42: #{tpu_custom_call.1} parent=5 // pred_check_branch
        %256 = sbr.rel (%p253) target = $region44
      $region43: #{tpu_custom_call.1} parent=5 // pred_region
        %s257 = ssub.s32 %s19, 1
        %s258 = sand.u32 %s32, 1
        %s259 = scalar_lea.sflag [#allocation4], %s258
        %s260 = sand.u32 %s32, 1
        %s261 = smul.addr %s260, 8
        %s262 = scalar_lea.vmem [#allocation3], %s261
        // Predicated region
        $region45: #{tpu_custom_call.1} parent=43 // pred_check
          %p263 = pneg %p45
        $region46: #{tpu_custom_call.1} parent=43 // pred_check_branch
          %265 = sbr.rel (%p263) target = $region48
        $region47: #{tpu_custom_call.1} parent=43 // pred_region
          %267 = dma.done %s259, 128
        $region48: #{tpu_custom_call.1} parent=43 // pred_fallthru
          _
        // Predicated region
        $region49: #{tpu_custom_call.1} parent=43 // pred_check
          %p268 = pneg %p66
        $region50: #{tpu_custom_call.1} parent=43 // pred_check_branch
          %270 = sbr.rel (%p268) target = $region52
        $region51: #{tpu_custom_call.1} parent=43 // pred_region
          %272 = dma.done [#allocation7], 256
        $region52: #{tpu_custom_call.1} parent=43 // pred_fallthru
          _
        // Predicated region
        $region53: #{tpu_custom_call.1} parent=43 // pred_check
          %p273 = pneg %p87
        $region54: #{tpu_custom_call.1} parent=43 // pred_check_branch
          %275 = sbr.rel (%p273) target = $region56
        $region55: #{tpu_custom_call.1} parent=43 // pred_region
          %277 = dma.done [#allocation7], 256
        $region56: #{tpu_custom_call.1} parent=43 // pred_fallthru
          _
        %s278 = sand.u32 %s32, 1
        %s279 = scalar_lea.sflag [#allocation4], %s278
        %s280 = sand.u32 %s32, 1
        %s281 = smul.addr %s280, 8
        %s282 = scalar_lea.vmem [#allocation3], %s281
        %p283 = pneg %p45
        %p284 = pneg %p42
        %p285 = pneg %p66
        %p286 = pneg %p63
        %p287 = pneg %p87
        %p288 = pneg %p84
        %p289 = pneg %p108
        %p290 = pneg %p105
        %p291 = pneg %p129
        %p292 = pneg %p126
        %p293 = pneg %p150
        %p294 = pneg %p147
        %p295 = pneg %p176
        %p296 = pneg %p173
        %s297 = sand.u32 %s163, 1
        %s298 = scalar_lea.sflag [#allocation5], %s297
        %s299 = sand.u32 %s163, 1
        %s300 = smul.addr %s299, 8
        %s301 = scalar_lea.vmem [#allocation9], %s300
        %v303 = vld [vmem:[%s262] sm:$0xff]
        %v304 = vld [vmem:[%s4] sm:$0x1]
        %v305 = vld [vmem:[%s5] sm:$0x1]
        %vm306 = vcmask 261120
        %v307 = vsel %vm306, %v303, 0.0
        %308 = vadd.xlane.f32.xlu0 %v307
        %v309 = vpop.xlane.xlu0 %308
        %v310 = vrcp.pop 32.0
        %v311 = vmul.f32 32.0, %v310
        %v312 = vsub.f32 1.0, %v311
        %v313 = vmul.f32 %v310, %v312
        %v314 = vadd.f32 %v310, %v313
        %vm315 = vweird.f32 %v310
        %v316 = vsel %vm315, %v310, %v314
        %v317 = vmul.f32 %v309, %v316
        %v318 = vsub.f32 %v303, %v317
        %v319 = vmul.f32 %v318, %v318
        %v320 = vsel %vm306, %v319, 0.0
        %321 = vadd.xlane.f32.xlu0 %v320
        %v322 = vpop.xlane.xlu0 %321
        %v323 = vmul.f32 %v322, %v316
        %v324 = vadd.f32 %v323, 1e-05
        %v325 = vrsqrt.pop %v324
        %v326 = vmul.f32 %v325, %v324
        %v327 = vmul.f32 %v326, %v325
        %v328 = vmul.f32 0.5, %v327
        %v329 = vsub.f32 1.5, %v328
        %v330 = vmul.f32 %v325, %v329
        %vm331 = vweird.f32 %v324
        %vm332 = vweird.f32 %v325
        %vm333 = vmor %vm331, %vm332
        %v334 = vsel %vm333, %v325, %v330
        %v335 = vmul.f32 %v318, %v334
        %v337 = vperm.slane %v304, 0
        %v339 = vmul.f32 %v335, %v337
        %v341 = vperm.slane %v305, 0
        %v343 = vadd.f32 %v339, %v341
        %v344 = vpack.c.bf16 %v343, %v343
        %v345 = vld [vmem:[#allocation6] sm:$0xf]
        %v346 = vld [vmem:[#allocation6 + $0x4] sm:$0xf]
        %v347 = vld [vmem:[#allocation6 + $0x8] sm:$0xf]
        %v348 = vld [vmem:[#allocation6 + $0xc] sm:$0xf]
        %v353 = vunpack.c.l.b16 %v345
        %v354 = vunpack.c.l.b16 %v346
        %v355 = vunpack.c.l.b16 %v347
        %v356 = vunpack.c.l.b16 %v348
        %v357 = vpack.c.b16 %v354, %v353
        %v358 = vpack.c.b16 %v356, %v355
        %v362 = vsel %vm306, %v344, 0
        %364 = vmatpush.bf16.msra.mxu0 0
        %365 = vmatpush.bf16.msra.mxu0 0
        %366 = vmatpush.bf16.msra.mxu0 0
        %367 = vmatpush.bf16.msra.mxu0 0
        %368 = vmatpush.bf16.msra.mxu0 0
        %369 = vmatpush.bf16.msra.mxu0 0
        %370 = vmatpush.bf16.msra.mxu0 %v358
        %371 = vmatpush.bf16.msra.mxu0 %v357
        %372 = vmatmul.bf16.gmra.mxu0 %v362
        %v373 = vpop.f32.mrf.mxu0
        %v374 = vadd.f32 0.0, %v373
        %v375 = vpop.f32.mrf.mxu0
        %376 = vdwg.mxu0
        %v377 = vpack.c.bf16 %v374, %v374
        %379 = vrot.lane.b32.xlu0 %v377, 96
        %v380 = vpop.permute.xlu0 %379
        %vm381 = vcmask 64512
        %v383 = vsel %vm381, %v377, 0
        %v386 = vsel %vm381, %v380, 0
        %388 = vmatpush.bf16.xpose.msra.mxu0 0
        %389 = vmatpush.bf16.xpose.msra.mxu0 0
        %390 = vmatpush.bf16.xpose.msra.mxu0 0
        %391 = vmatpush.bf16.xpose.msra.mxu0 0
        %392 = vmatpush.bf16.xpose.msra.mxu0 0
        %393 = vmatpush.bf16.xpose.msra.mxu0 0
        %394 = vmatpush.bf16.xpose.msra.mxu0 0
        %395 = vmatpush.bf16.xpose.msra.mxu0 %v386
        %396 = vmatmul.bf16.gmra.mxu0 %v383
        %v397 = vpop.f32.mrf.mxu0
        %v398 = vadd.f32 0.0, %v397
        %v399 = vpop.f32.mrf.mxu0
        %400 = vdwg.mxu0
        %v401 = vsel %vm381, %v398, -inf
        %402 = vmax.xlane.f32.xlu0 %v401
        %v403 = vpop.xlane.xlu0 %402
        %v404 = vsub.f32 %v398, %v403
        %v405 = vmul.f32 %v404, 1.442695
        %v406 = vpow.pop %v405
        %v407 = vsel %vm381, %v406, 0.0
        %408 = vadd.xlane.f32.xlu0 %v407
        %v409 = vpop.xlane.xlu0 %408
        %v410 = vrcp.pop %v409
        %v411 = vmul.f32 %v406, %v410
        %v412 = vpack.c.bf16 %v411, %v411
        %413 = vrot.lane.b32.xlu0 %v377, 64
        %v414 = vpop.permute.xlu0 %413
        %v416 = vsel %vm381, %v412, 0
        %vm418 = vcmask 1043456
        %v420 = vsel %vm418, %v414, 0
        %422 = vmatpush.bf16.msra.mxu0 0
        %423 = vmatpush.bf16.msra.mxu0 0
        %424 = vmatpush.bf16.msra.mxu0 0
        %425 = vmatpush.bf16.msra.mxu0 0
        %426 = vmatpush.bf16.msra.mxu0 0
        %427 = vmatpush.bf16.msra.mxu0 0
        %428 = vmatpush.bf16.msra.mxu0 0
        %429 = vmatpush.bf16.msra.mxu0 %v420
        %430 = vmatmul.bf16.gmra.mxu0 %v416
        %v431 = vpop.f32.mrf.mxu0
        %v432 = vadd.f32 0.0, %v431
        %v433 = vpop.f32.mrf.mxu0
        %434 = vdwg.mxu0
        %435 = vst.msk [vmem:[#allocation2] sm:$0xff] %vm381, %v432
        %436 = vrot.lane.b32.xlu0 %v377, 120
        %v437 = vpop.permute.xlu0 %436
        %438 = vrot.lane.b32.xlu0 %v377, 88
        %v439 = vpop.permute.xlu0 %438
        %v441 = vsel %vm381, %v437, 0
        %v444 = vsel %vm381, %v439, 0
        %446 = vmatpush.bf16.xpose.msra.mxu0 0
        %447 = vmatpush.bf16.xpose.msra.mxu0 0
        %448 = vmatpush.bf16.xpose.msra.mxu0 0
        %449 = vmatpush.bf16.xpose.msra.mxu0 0
        %450 = vmatpush.bf16.xpose.msra.mxu0 0
        %451 = vmatpush.bf16.xpose.msra.mxu0 0
        %452 = vmatpush.bf16.xpose.msra.mxu0 0
        %453 = vmatpush.bf16.xpose.msra.mxu0 %v444
        %454 = vmatmul.bf16.gmra.mxu0 %v441
        %v455 = vpop.f32.mrf.mxu0
        %v456 = vadd.f32 0.0, %v455
        %v457 = vpop.f32.mrf.mxu0
        %458 = vdwg.mxu0
        %v459 = vsel %vm381, %v456, -inf
        %460 = vmax.xlane.f32.xlu0 %v459
        %v461 = vpop.xlane.xlu0 %460
        %v462 = vsub.f32 %v456, %v461
        %v463 = vmul.f32 %v462, 1.442695
        %v464 = vpow.pop %v463
        %v465 = vsel %vm381, %v464, 0.0
        %466 = vadd.xlane.f32.xlu0 %v465
        %v467 = vpop.xlane.xlu0 %466
        %v468 = vrcp.pop %v467
        %v469 = vmul.f32 %v464, %v468
        %v470 = vpack.c.bf16 %v469, %v469
        %471 = vrot.lane.b32.xlu0 %v377, 56
        %v472 = vpop.permute.xlu0 %471
        %v474 = vsel %vm381, %v470, 0
        %v477 = vsel %vm418, %v472, 0
        %479 = vmatpush.bf16.msra.mxu0 0
        %480 = vmatpush.bf16.msra.mxu0 0
        %481 = vmatpush.bf16.msra.mxu0 0
        %482 = vmatpush.bf16.msra.mxu0 0
        %483 = vmatpush.bf16.msra.mxu0 0
        %484 = vmatpush.bf16.msra.mxu0 0
        %485 = vmatpush.bf16.msra.mxu0 0
        %486 = vmatpush.bf16.msra.mxu0 %v477
        %487 = vmatmul.bf16.gmra.mxu0 %v474
        %v488 = vpop.f32.mrf.mxu0
        %v489 = vadd.f32 0.0, %v488
        %v490 = vpop.f32.mrf.mxu0
        %491 = vdwg.mxu0
        %493 = vrot.lane.b32.xlu0 %v489, 8
        %v494 = vpop.permute.xlu0 %493
        %vm496 = vcmask 130112
        %497 = vst.msk [vmem:[#allocation2] sm:$0xff] %vm496, %v494
        %498 = vrot.lane.b32.xlu0 %v377, 112
        %v499 = vpop.permute.xlu0 %498
        %500 = vrot.lane.b32.xlu0 %v377, 80
        %v501 = vpop.permute.xlu0 %500
        %v503 = vsel %vm381, %v499, 0
        %v506 = vsel %vm381, %v501, 0
        %508 = vmatpush.bf16.xpose.msra.mxu0 0
        %509 = vmatpush.bf16.xpose.msra.mxu0 0
        %510 = vmatpush.bf16.xpose.msra.mxu0 0
        %511 = vmatpush.bf16.xpose.msra.mxu0 0
        %512 = vmatpush.bf16.xpose.msra.mxu0 0
        %513 = vmatpush.bf16.xpose.msra.mxu0 0
        %514 = vmatpush.bf16.xpose.msra.mxu0 0
        %515 = vmatpush.bf16.xpose.msra.mxu0 %v506
        %516 = vmatmul.bf16.gmra.mxu0 %v503
        %v517 = vpop.f32.mrf.mxu0
        %v518 = vadd.f32 0.0, %v517
        %v519 = vpop.f32.mrf.mxu0
        %520 = vdwg.mxu0
        %v521 = vsel %vm381, %v518, -inf
        %522 = vmax.xlane.f32.xlu0 %v521
        %v523 = vpop.xlane.xlu0 %522
        %v524 = vsub.f32 %v518, %v523
        %v525 = vmul.f32 %v524, 1.442695
        %v526 = vpow.pop %v525
        %v527 = vsel %vm381, %v526, 0.0
        %528 = vadd.xlane.f32.xlu0 %v527
        %v529 = vpop.xlane.xlu0 %528
        %v530 = vrcp.pop %v529
        %v531 = vmul.f32 %v526, %v530
        %v532 = vpack.c.bf16 %v531, %v531
        %533 = vrot.lane.b32.xlu0 %v377, 48
        %v534 = vpop.permute.xlu0 %533
        %v536 = vsel %vm381, %v532, 0
        %v539 = vsel %vm418, %v534, 0
        %541 = vmatpush.bf16.msra.mxu0 0
        %542 = vmatpush.bf16.msra.mxu0 0
        %543 = vmatpush.bf16.msra.mxu0 0
        %544 = vmatpush.bf16.msra.mxu0 0
        %545 = vmatpush.bf16.msra.mxu0 0
        %546 = vmatpush.bf16.msra.mxu0 0
        %547 = vmatpush.bf16.msra.mxu0 0
        %548 = vmatpush.bf16.msra.mxu0 %v539
        %549 = vmatmul.bf16.gmra.mxu0 %v536
        %v550 = vpop.f32.mrf.mxu0
        %v551 = vadd.f32 0.0, %v550
        %v552 = vpop.f32.mrf.mxu0
        %553 = vdwg.mxu0
        %555 = vrot.lane.b32.xlu0 %v551, 16
        %v556 = vpop.permute.xlu0 %555
        %vm558 = vcmask 195712
        %559 = vst.msk [vmem:[#allocation2] sm:$0xff] %vm558, %v556
        %560 = vrot.lane.b32.xlu0 %v377, 104
        %v561 = vpop.permute.xlu0 %560
        %562 = vrot.lane.b32.xlu0 %v377, 72
        %v563 = vpop.permute.xlu0 %562
        %v565 = vsel %vm381, %v561, 0
        %v568 = vsel %vm381, %v563, 0
        %570 = vmatpush.bf16.xpose.msra.mxu0 0
        %571 = vmatpush.bf16.xpose.msra.mxu0 0
        %572 = vmatpush.bf16.xpose.msra.mxu0 0
        %573 = vmatpush.bf16.xpose.msra.mxu0 0
        %574 = vmatpush.bf16.xpose.msra.mxu0 0
        %575 = vmatpush.bf16.xpose.msra.mxu0 0
        %576 = vmatpush.bf16.xpose.msra.mxu0 0
        %577 = vmatpush.bf16.xpose.msra.mxu0 %v568
        %578 = vmatmul.bf16.gmra.mxu0 %v565
        %v579 = vpop.f32.mrf.mxu0
        %v580 = vadd.f32 0.0, %v579
        %v581 = vpop.f32.mrf.mxu0
        %582 = vdwg.mxu0
        %v583 = vsel %vm381, %v580, -inf
        %584 = vmax.xlane.f32.xlu0 %v583
        %v585 = vpop.xlane.xlu0 %584
        %v586 = vsub.f32 %v580, %v585
        %v587 = vmul.f32 %v586, 1.442695
        %v588 = vpow.pop %v587
        %v589 = vsel %vm381, %v588, 0.0
        %590 = vadd.xlane.f32.xlu0 %v589
        %v591 = vpop.xlane.xlu0 %590
        %v592 = vrcp.pop %v591
        %v593 = vmul.f32 %v588, %v592
        %v594 = vpack.c.bf16 %v593, %v593
        %595 = vrot.lane.b32.xlu0 %v377, 40
        %v596 = vpop.permute.xlu0 %595
        %v598 = vsel %vm381, %v594, 0
        %v601 = vsel %vm418, %v596, 0
        %603 = vmatpush.bf16.msra.mxu0 0
        %604 = vmatpush.bf16.msra.mxu0 0
        %605 = vmatpush.bf16.msra.mxu0 0
        %606 = vmatpush.bf16.msra.mxu0 0
        %607 = vmatpush.bf16.msra.mxu0 0
        %608 = vmatpush.bf16.msra.mxu0 0
        %609 = vmatpush.bf16.msra.mxu0 0
        %610 = vmatpush.bf16.msra.mxu0 %v601
        %611 = vmatmul.bf16.gmra.mxu0 %v598
        %v612 = vpop.f32.mrf.mxu0
        %v613 = vadd.f32 0.0, %v612
        %v614 = vpop.f32.mrf.mxu0
        %615 = vdwg.mxu0
        %617 = vrot.lane.b32.xlu0 %v613, 24
        %v618 = vpop.permute.xlu0 %617
        %vm620 = vcmask 261312
        %621 = vst.msk [vmem:[#allocation2] sm:$0xff] %vm620, %v618
        %v622 = vld [vmem:[#allocation2] sm:$0xff]
        %v623 = vpack.c.bf16 %v622, %v622
        %v624 = vld [vmem:[#allocation8] sm:$0xf]
        %v625 = vld [vmem:[#allocation8 + $0x4] sm:$0xf]
        %v626 = vld [vmem:[#allocation8 + $0x8] sm:$0xf]
        %v627 = vld [vmem:[#allocation8 + $0xc] sm:$0xf]
        %v628 = vld [vmem:[%s3] sm:$0x1]
        %v630 = vperm.slane %v628, 0
        %v636 = vunpack.c.l.b16 %v624
        %v637 = vunpack.c.l.b16 %v625
        %v638 = vunpack.c.l.b16 %v626
        %v639 = vunpack.c.l.b16 %v627
        %v640 = vpack.c.b16 %v637, %v636
        %v641 = vpack.c.b16 %v639, %v638
        %v645 = vsel %vm306, %v623, 0
        %647 = vmatpush.bf16.msra.mxu0 0
        %648 = vmatpush.bf16.msra.mxu0 0
        %649 = vmatpush.bf16.msra.mxu0 0
        %650 = vmatpush.bf16.msra.mxu0 0
        %651 = vmatpush.bf16.msra.mxu0 0
        %652 = vmatpush.bf16.msra.mxu0 0
        %653 = vmatpush.bf16.msra.mxu0 %v641
        %654 = vmatpush.bf16.msra.mxu0 %v640
        %655 = vmatmul.bf16.gmra.mxu0 %v645
        %v656 = vpop.f32.mrf.mxu0
        %v657 = vadd.f32 %v630, %v656
        %v658 = vpop.f32.mrf.mxu0
        %659 = vdwg.mxu0
        %v660 = vadd.f32 %v303, %v657
        %661 = vst.msk [vmem:[%s301] sm:$0xff] %vm306, %v660
        %s662 = sand.u32 %s163, 1
        %s663 = scalar_lea.sflag [#allocation5], %s662
        %s664 = sand.u32 %s163, 1
        %s665 = smul.addr %s664, 8
        %s666 = scalar_lea.vmem [#allocation9], %s665
        // Predicated region
        $region57: #{tpu_custom_call.1} parent=43 // pred_check
          %p667 = pneg %p173
        $region58: #{tpu_custom_call.1} parent=43 // pred_check_branch
          %669 = sbr.rel (%p667) target = $region60
        $region59: #{tpu_custom_call.1} parent=43 // pred_region
          %671 = vsyncadd %s663, 0
          %s672 = smul.addr %s24, 8
          %s673 = scalar_lea.hbm %s6, %s672
          %s675 = sshll.u32 %s666, 4
          %s676 = int_to_ptr.vmem [resolvable:$true] %s675
          %s677 = sshll.u32 %s673, 4
          %s678 = int_to_ptr.hbm [resolvable:$true] %s677
          %680 = dma.vmem_to_hbm [thread:$0]  %s676, 128, %s678, %s663
        $region60: #{tpu_custom_call.1} parent=43 // pred_fallthru
          _
      $region44: #{tpu_custom_call.1} parent=5 // pred_fallthru
        _
      %p681 = scmp.le.s32.totalorder 2, %s19
      // Predicated region
      $region61: #{tpu_custom_call.1} parent=5 // pred_check
        %p682 = pneg %p681
      $region62: #{tpu_custom_call.1} parent=5 // pred_check_branch
        %684 = sbr.rel (%p682) target = $region64
      $region63: #{tpu_custom_call.1} parent=5 // pred_region
        %s685 = ssub.s32 %s19, 2
        // Predicated region
        $region65: #{tpu_custom_call.1} parent=63 // pred_check
          %p686 = pneg %p179
        $region66: #{tpu_custom_call.1} parent=63 // pred_check_branch
          %688 = sbr.rel (%p686) target = $region68
        $region67: #{tpu_custom_call.1} parent=63 // pred_region
          %s689 = sand.u32 %s164, 1
          %s690 = scalar_lea.sflag [#allocation5], %s689
          %s691 = sand.u32 %s164, 1
          %s692 = smul.addr %s691, 8
          %s693 = scalar_lea.vmem [#allocation9], %s692
          %695 = dma.done %s690, 128
        $region68: #{tpu_custom_call.1} parent=63 // pred_fallthru
          _
      $region64: #{tpu_custom_call.1} parent=5 // pred_fallthru
        _
    $region6: #{tpu_custom_call.1} parent=1 // loop_footer
      %s23 = sadd.s32 1, %s19
    $region7: #{tpu_custom_call.1} parent=1 // loop_footer_branch
      %18 = sbr.rel target = $region3
    $region8: #{tpu_custom_call.1} parent=1 // loop_exit
      _
    %696 = vsyncpa [#allocation4], 1
    %s697 = scalar_lea.sflag [#allocation4], 1
    %698 = vsyncpa %s697, 1
    %699 = vsyncpa [#allocation7], 1
    %700 = vsyncpa [#allocation5], 1
    %s701 = scalar_lea.sflag [#allocation5], 1
    %702 = vsyncpa %s701, 1

// kernel: tpu_custom_call.1
$region0: #{tpu_custom_call.1}
  #allocation0 [shape = 'u32[]', space=smem, size = 0x4, offset = 0x4, fixed_abs, tag = 'smem constant byte address 0x4 - core index']
  #allocation1 [shape = 'u32[72,128]{1,0:T(1,128)}', space=vmem, size = 0x9000, scoped, tag = 'internal scratch']
  #allocation2 [shape = 'f32[8,32]{1,0:T(8,128)}', space=vmem, size = 0x1000, scoped, tag = 'scratch operand']
  %s0 = inlined_call_operand.hbm [shape: f32[2,8,32], index: 0, kind: input, shape index: {}]
  %s1 = inlined_call_operand.hbm [shape: bf16[32,96], index: 1, kind: input, shape index: {}]
  %s2 = inlined_call_operand.hbm [shape: bf16[32,32], index: 2, kind: input, shape index: {}]
  %s3 = inlined_call_operand.vmem [shape: f32[1,32], index: 3, kind: input, shape index: {}]
  %s4 = inlined_call_operand.vmem [shape: f32[1,32], index: 4, kind: input, shape index: {}]
  %s5 = inlined_call_operand.vmem [shape: f32[1,32], index: 5, kind: input, shape index: {}]
  %s6 = inlined_call_operand.hbm [shape: f32[2,8,32], index: 6, kind: output, shape index: {}]
  %s7 = sld [smem:[#allocation0]]
  $region69: #{tpu_custom_call.1} parent=0
    _
  %s9 = ssub.s32 1, %s7
  %s10 = scalar_select 0, %s9, %s7
  $region1: #{tpu_custom_call.1} parent=0
    #allocation3 [shape = 'u8[8192]{0}', space=vmem, size = 0x2000, scoped, tag = 'input window, operand 0']
    #allocation4 [shape = 's32[2]{0}', space=sflag, size = 0x8, scoped, tag = 'scoped memory for tpu_custom_call.1']
    #allocation5 [shape = 's32[2]{0}', space=sflag, size = 0x8, scoped, tag = 'scoped memory for tpu_custom_call.1']
    #allocation6 [shape = 'u8[8192]{0}', space=vmem, size = 0x2000, scoped, tag = 'input window, operand 1, single buffered']
    #allocation7 [shape = 's32[1]{0}', space=sflag, size = 0x4, scoped, tag = 'scoped memory for tpu_custom_call.1']
    #allocation8 [shape = 'u8[8192]{0}', space=vmem, size = 0x2000, scoped, tag = 'input window, operand 2, single buffered']
    #allocation9 [shape = 'u8[8192]{0}', space=vmem, size = 0x2000, scoped, tag = 'output window, operand 0']
    %11 = vsyncpa [#allocation4], 0
    %s12 = scalar_lea.sflag [#allocation4], 1
    %13 = vsyncpa %s12, 0
    %14 = vsyncpa [#allocation7], 0
    %15 = vsyncpa [#allocation5], 0
    %s16 = scalar_lea.sflag [#allocation5], 1
    %17 = vsyncpa %s16, 0
    loop: start=0, step=1, limit=4
    $region2: #{tpu_custom_call.1} parent=1 // loop_pre_header
      _
    $region3: #{tpu_custom_call.1} parent=1 // loop_header
      %s19 = sphi 0, %s23
      %p20 = scmp.ge.s32.totalorder %s19, 4
      %s29 = sphi 0, %s31
      %s32 = sphi 0, %s29
      %s33 = sphi 0, %s32
      %s49 = sphi 0, %s33
      %s53 = sphi 0, %s53
      %s55 = sphi 0, %s53
      %s56 = sphi 0, %s55
      %s70 = sphi 0, %s56
      %s74 = sphi 0, %s74
      %s76 = sphi 0, %s74
      %s77 = sphi 0, %s76
      %s91 = sphi 0, %s77
      %s95 = sphi 0, %s95
      %s97 = sphi 0, %s95
      %s98 = sphi 0, %s97
      %s112 = sphi 0, %s98
      %s116 = sphi 0, %s116
      %s118 = sphi 0, %s116
      %s119 = sphi 0, %s118
      %s133 = sphi 0, %s119
      %s137 = sphi 0, %s137
      %s139 = sphi 0, %s137
      %s140 = sphi 0, %s139
      %s154 = sphi 0, %s140
      %s160 = sphi 0, %s162
      %s163 = sphi 0, %s160
      %s164 = sphi 0, %s163
      %s180 = sphi 0, %s164
    $region4: #{tpu_custom_call.1} parent=1 // loop_header_branch
      %22 = sbr.rel (%p20) target = $region8
    $region5: #{tpu_custom_call.1} parent=1 // loop_body
      %s24 = ssub.s32 %s19, 1
      %s25 = ssub.s32 %s19, 2
      %s26 = sadd.s32 %s19, 1
      %s27 = ssub.s32 %s19, %s26
      %p28 = scmp.eq.s32.totalorder %s27, 0
      %s30 = sadd.s32 %s29, 1
      %s31 = scalar_select %p28, %s29, %s30
      %p34 = pneg %p28
      %p35 = scmp.eq.s32.totalorder %s19, 1
      %p36 = por %p34, %p35
      %p37 = scmp.ne.s32.totalorder %s29, %s32
      %p38 = scmp.eq.s32.totalorder %s19, 0
      %p39 = por %p37, %p38
      %p40 = scmp.ne.s32.totalorder %s29, %s32
      %p41 = scmp.eq.s32.totalorder %s24, 1
      %p42 = por %p40, %p41
      %p43 = scmp.ne.s32.totalorder %s32, %s33
      %p44 = scmp.eq.s32.totalorder %s24, 0
      %p45 = por %p43, %p44
      %p46 = scmp.ne.s32.totalorder %s32, %s33
      %p47 = scmp.eq.s32.totalorder %s25, 1
      %p48 = por %p46, %p47
      %p50 = scmp.ne.s32.totalorder %s33, %s49
      %p51 = scmp.eq.s32.totalorder %s25, 0
      %p52 = por %p50, %p51
      %s54 = sadd.s32 %s53, 1
      %p57 = scmp.eq.s32.totalorder %s19, 1
      %p58 = scmp.ne.s32.totalorder %s53, %s55
      %p59 = scmp.eq.s32.totalorder %s19, 0
      %p60 = por %p58, %p59
      %p61 = scmp.ne.s32.totalorder %s53, %s55
      %p62 = scmp.eq.s32.totalorder %s24, 1
      %p63 = por %p61, %p62
      %p64 = scmp.ne.s32.totalorder %s55, %s56
      %p65 = scmp.eq.s32.totalorder %s24, 0
      %p66 = por %p64, %p65
      %p67 = scmp.ne.s32.totalorder %s55, %s56
      %p68 = scmp.eq.s32.totalorder %s25, 1
      %p69 = por %p67, %p68
      %p71 = scmp.ne.s32.totalorder %s56, %s70
      %p72 = scmp.eq.s32.totalorder %s25, 0
      %p73 = por %p71, %p72
      %s75 = sadd.s32 %s74, 1
      %p78 = scmp.eq.s32.totalorder %s19, 1
      %p79 = scmp.ne.s32.totalorder %s74, %s76
      %p80 = scmp.eq.s32.totalorder %s19, 0
      %p81 = por %p79, %p80
      %p82 = scmp.ne.s32.totalorder %s74, %s76
      %p83 = scmp.eq.s32.totalorder %s24, 1
      %p84 = por %p82, %p83
      %p85 = scmp.ne.s32.totalorder %s76, %s77
      %p86 = scmp.eq.s32.totalorder %s24, 0
      %p87 = por %p85, %p86
      %p88 = scmp.ne.s32.totalorder %s76, %s77
      %p89 = scmp.eq.s32.totalorder %s25, 1
      %p90 = por %p88, %p89
      %p92 = scmp.ne.s32.totalorder %s77, %s91
      %p93 = scmp.eq.s32.totalorder %s25, 0
      %p94 = por %p92, %p93
      %s96 = sadd.s32 %s95, 1
      %p99 = scmp.eq.s32.totalorder %s19, 1
      %p100 = scmp.ne.s32.totalorder %s95, %s97
      %p101 = scmp.eq.s32.totalorder %s19, 0
      %p102 = por %p100, %p101
      %p103 = scmp.ne.s32.totalorder %s95, %s97
      %p104 = scmp.eq.s32.totalorder %s24, 1
      %p105 = por %p103, %p104
      %p106 = scmp.ne.s32.totalorder %s97, %s98
      %p107 = scmp.eq.s32.totalorder %s24, 0
      %p108 = por %p106, %p107
      %p109 = scmp.ne.s32.totalorder %s97, %s98
      %p110 = scmp.eq.s32.totalorder %s25, 1
      %p111 = por %p109, %p110
      %p113 = scmp.ne.s32.totalorder %s98, %s112
      %p114 = scmp.eq.s32.totalorder %s25, 0
      %p115 = por %p113, %p114
      %s117 = sadd.s32 %s116, 1
      %p120 = scmp.eq.s32.totalorder %s19, 1
      %p121 = scmp.ne.s32.totalorder %s116, %s118
      %p122 = scmp.eq.s32.totalorder %s19, 0
      %p123 = por %p121, %p122
      %p124 = scmp.ne.s32.totalorder %s116, %s118
      %p125 = scmp.eq.s32.totalorder %s24, 1
      %p126 = por %p124, %p125
      %p127 = scmp.ne.s32.totalorder %s118, %s119
      %p128 = scmp.eq.s32.totalorder %s24, 0
      %p129 = por %p127, %p128
      %p130 = scmp.ne.s32.totalorder %s118, %s119
      %p131 = scmp.eq.s32.totalorder %s25, 1
      %p132 = por %p130, %p131
      %p134 = scmp.ne.s32.totalorder %s119, %s133
      %p135 = scmp.eq.s32.totalorder %s25, 0
      %p136 = por %p134, %p135
      %s138 = sadd.s32 %s137, 1
      %p141 = scmp.eq.s32.totalorder %s19, 1
      %p142 = scmp.ne.s32.totalorder %s137, %s139
      %p143 = scmp.eq.s32.totalorder %s19, 0
      %p144 = por %p142, %p143
      %p145 = scmp.ne.s32.totalorder %s137, %s139
      %p146 = scmp.eq.s32.totalorder %s24, 1
      %p147 = por %p145, %p146
      %p148 = scmp.ne.s32.totalorder %s139, %s140
      %p149 = scmp.eq.s32.totalorder %s24, 0
      %p150 = por %p148, %p149
      %p151 = scmp.ne.s32.totalorder %s139, %s140
      %p152 = scmp.eq.s32.totalorder %s25, 1
      %p153 = por %p151, %p152
      %p155 = scmp.ne.s32.totalorder %s140, %s154
      %p156 = scmp.eq.s32.totalorder %s25, 0
      %p157 = por %p155, %p156
      %s158 = ssub.s32 %s19, %s26
      %p159 = scmp.eq.s32.totalorder %s158, 0
      %s161 = sadd.s32 %s160, 1
      %s162 = scalar_select %p159, %s160, %s161
      %p165 = pneg %p159
      %p166 = scmp.eq.s32.totalorder %s19, 1
      %p167 = por %p165, %p166
      %p168 = scmp.ne.s32.totalorder %s160, %s163
      %p169 = scmp.eq.s32.totalorder %s19, 0
      %p170 = por %p168, %p169
      %p171 = scmp.ne.s32.totalorder %s160, %s163
      %p172 = scmp.eq.s32.totalorder %s24, 1
      %p173 = por %p171, %p172
      %p174 = scmp.ne.s32.totalorder %s163, %s164
      %p175 = scmp.eq.s32.totalorder %s24, 0
      %p176 = por %p174, %p175
      %p177 = scmp.ne.s32.totalorder %s163, %s164
      %p178 = scmp.eq.s32.totalorder %s25, 1
      %p179 = por %p177, %p178
      %p181 = scmp.ne.s32.totalorder %s164, %s180
      %p182 = scmp.eq.s32.totalorder %s25, 0
      %p183 = por %p181, %p182
      %p184 = scmp.le.s32.totalorder 1, %s19
      %p185 = scmp.lt.s32.totalorder %s19, 3
      %p186 = pnand %p184, %p185
      %p187 = pneg %p186
      // Predicated region
      $region9: #{tpu_custom_call.1} parent=5 // pred_check
        _
      $region10: #{tpu_custom_call.1} parent=5 // pred_check_branch
        %189 = sbr.rel (%p186) target = $region12
      $region11: #{tpu_custom_call.1} parent=5 // pred_region
        %s190 = ssub.s32 %s19, 1
        // Predicated region
        $region13: #{tpu_custom_call.1} parent=11 // pred_check
          %p191 = pneg %p66
        $region14: #{tpu_custom_call.1} parent=11 // pred_check_branch
          %193 = sbr.rel (%p191) target = $region16
        $region15: #{tpu_custom_call.1} parent=11 // pred_region
          %195 = vsyncadd [#allocation7], 0
          %s196 = sshll.u32 %s1, 4
          %s197 = int_to_ptr.hbm [resolvable:$true] %s196
          %s198 = sshll.u32 [#allocation6], 4
          %s199 = int_to_ptr.vmem [resolvable:$true] %s198
          %204 = dma.hbm_to_vmem [thread:$0]  %s197, 256, %s199, [#allocation7], 64, 64, 4
        $region16: #{tpu_custom_call.1} parent=11 // pred_fallthru
          _
        // Predicated region
        $region17: #{tpu_custom_call.1} parent=11 // pred_check
          %p205 = pneg %p87
        $region18: #{tpu_custom_call.1} parent=11 // pred_check_branch
          %207 = sbr.rel (%p205) target = $region20
        $region19: #{tpu_custom_call.1} parent=11 // pred_region
          %209 = vsyncadd [#allocation7], 0
          %s210 = sshll.u32 %s2, 4
          %s211 = int_to_ptr.hbm [resolvable:$true] %s210
          %s212 = sshll.u32 [#allocation8], 4
          %s213 = int_to_ptr.vmem [resolvable:$true] %s212
          %218 = dma.hbm_to_vmem [thread:$0]  %s211, 256, %s213, [#allocation7], 64, 64, 4
        $region20: #{tpu_custom_call.1} parent=11 // pred_fallthru
          _
        // Predicated region
        $region21: #{tpu_custom_call.1} parent=11 // pred_check
          %p219 = pneg %p108
        $region22: #{tpu_custom_call.1} parent=11 // pred_check_branch
          %221 = sbr.rel (%p219) target = $region24
        $region23: #{tpu_custom_call.1} parent=11 // pred_region
          _
        $region24: #{tpu_custom_call.1} parent=11 // pred_fallthru
          _
        // Predicated region
        $region25: #{tpu_custom_call.1} parent=11 // pred_check
          %p222 = pneg %p129
        $region26: #{tpu_custom_call.1} parent=11 // pred_check_branch
          %224 = sbr.rel (%p222) target = $region28
        $region27: #{tpu_custom_call.1} parent=11 // pred_region
          _
        $region28: #{tpu_custom_call.1} parent=11 // pred_fallthru
          _
        // Predicated region
        $region29: #{tpu_custom_call.1} parent=11 // pred_check
          %p225 = pneg %p150
        $region30: #{tpu_custom_call.1} parent=11 // pred_check_branch
          %227 = sbr.rel (%p225) target = $region32
        $region31: #{tpu_custom_call.1} parent=11 // pred_region
          _
        $region32: #{tpu_custom_call.1} parent=11 // pred_fallthru
          _
      $region12: #{tpu_custom_call.1} parent=5 // pred_fallthru
        _
      %p228 = scmp.lt.s32.totalorder %s19, 2
      // Predicated region
      $region33: #{tpu_custom_call.1} parent=5 // pred_check
        %p229 = pneg %p228
      $region34: #{tpu_custom_call.1} parent=5 // pred_check_branch
        %231 = sbr.rel (%p229) target = $region36
      $region35: #{tpu_custom_call.1} parent=5 // pred_region
        // Predicated region
        $region37: #{tpu_custom_call.1} parent=35 // pred_check
          %p232 = pneg %p39
        $region38: #{tpu_custom_call.1} parent=35 // pred_check_branch
          %234 = sbr.rel (%p232) target = $region40
        $region39: #{tpu_custom_call.1} parent=35 // pred_region
          %s235 = sand.u32 %s29, 1
          %s236 = scalar_lea.sflag [#allocation4], %s235
          %s237 = sand.u32 %s29, 1
          %s238 = smul.addr %s237, 8
          %s239 = scalar_lea.vmem [#allocation3], %s238
          %241 = vsyncadd %s236, 0
          %s242 = smul.addr %s19, 8
          %s243 = scalar_lea.hbm %s0, %s242
          %s245 = sshll.u32 %s243, 4
          %s246 = int_to_ptr.hbm [resolvable:$true] %s245
          %s247 = sshll.u32 %s239, 4
          %s248 = int_to_ptr.vmem [resolvable:$true] %s247
          %250 = dma.hbm_to_vmem [thread:$0]  %s246, 128, %s248, %s236
        $region40: #{tpu_custom_call.1} parent=35 // pred_fallthru
          _
      $region36: #{tpu_custom_call.1} parent=5 // pred_fallthru
        _
      %p251 = scmp.le.s32.totalorder 1, %s19
      %p252 = scmp.lt.s32.totalorder %s19, 3
      %p253 = pnand %p251, %p252
      %p254 = pneg %p253
      // Predicated region
      $region41: #{tpu_custom_call.1} parent=5 // pred_check
        _
      $region42: #{tpu_custom_call.1} parent=5 // pred_check_branch
        %256 = sbr.rel (%p253) target = $region44
      $region43: #{tpu_custom_call.1} parent=5 // pred_region
        %s257 = ssub.s32 %s19, 1
        %s258 = sand.u32 %s32, 1
        %s259 = scalar_lea.sflag [#allocation4], %s258
        %s260 = sand.u32 %s32, 1
        %s261 = smul.addr %s260, 8
        %s262 = scalar_lea.vmem [#allocation3], %s261
        // Predicated region
        $region45: #{tpu_custom_call.1} parent=43 // pred_check
          %p263 = pneg %p45
        $region46: #{tpu_custom_call.1} parent=43 // pred_check_branch
          %265 = sbr.rel (%p263) target = $region48
        $region47: #{tpu_custom_call.1} parent=43 // pred_region
          %267 = dma.done %s259, 128
        $region48: #{tpu_custom_call.1} parent=43 // pred_fallthru
          _
        // Predicated region
        $region49: #{tpu_custom_call.1} parent=43 // pred_check
          %p268 = pneg %p66
        $region50: #{tpu_custom_call.1} parent=43 // pred_check_branch
          %270 = sbr.rel (%p268) target = $region52
        $region51: #{tpu_custom_call.1} parent=43 // pred_region
          %272 = dma.done [#allocation7], 256
        $region52: #{tpu_custom_call.1} parent=43 // pred_fallthru
          _
        // Predicated region
        $region53: #{tpu_custom_call.1} parent=43 // pred_check
          %p273 = pneg %p87
        $region54: #{tpu_custom_call.1} parent=43 // pred_check_branch
          %275 = sbr.rel (%p273) target = $region56
        $region55: #{tpu_custom_call.1} parent=43 // pred_region
          %277 = dma.done [#allocation7], 256
        $region56: #{tpu_custom_call.1} parent=43 // pred_fallthru
          _
        %s278 = sand.u32 %s32, 1
        %s279 = scalar_lea.sflag [#allocation4], %s278
        %s280 = sand.u32 %s32, 1
        %s281 = smul.addr %s280, 8
        %s282 = scalar_lea.vmem [#allocation3], %s281
        %p283 = pneg %p45
        %p284 = pneg %p42
        %p285 = pneg %p66
        %p286 = pneg %p63
        %p287 = pneg %p87
        %p288 = pneg %p84
        %p289 = pneg %p108
        %p290 = pneg %p105
        %p291 = pneg %p129
        %p292 = pneg %p126
        %p293 = pneg %p150
        %p294 = pneg %p147
        %p295 = pneg %p176
        %p296 = pneg %p173
        %s297 = sand.u32 %s163, 1
        %s298 = scalar_lea.sflag [#allocation5], %s297
        %s299 = sand.u32 %s163, 1
        %s300 = smul.addr %s299, 8
        %s301 = scalar_lea.vmem [#allocation9], %s300
        %v303 = vld [vmem:[%s262] sm:$0xff]
        %v304 = vld [vmem:[%s4] sm:$0x1]
        %v305 = vld [vmem:[%s5] sm:$0x1]
        %vm306 = vcmask 261120
        %v307 = vsel %vm306, %v303, 0.0
        %308 = vadd.xlane.f32.xlu0 %v307
        %v309 = vpop.xlane.xlu0 %308
        %v310 = vrcp.pop 32.0
        %v311 = vmul.f32 32.0, %v310
        %v312 = vsub.f32 1.0, %v311
        %v313 = vmul.f32 %v310, %v312
        %v314 = vadd.f32 %v310, %v313
        %vm315 = vweird.f32 %v310
        %v316 = vsel %vm315, %v310, %v314
        %v317 = vmul.f32 %v309, %v316
        %v318 = vsub.f32 %v303, %v317
        %v319 = vmul.f32 %v318, %v318
        %v320 = vsel %vm306, %v319, 0.0
        %321 = vadd.xlane.f32.xlu0 %v320
        %v322 = vpop.xlane.xlu0 %321
        %v323 = vmul.f32 %v322, %v316
        %v324 = vadd.f32 %v323, 1e-05
        %v325 = vrsqrt.pop %v324
        %v326 = vmul.f32 %v325, %v324
        %v327 = vmul.f32 %v326, %v325
        %v328 = vmul.f32 0.5, %v327
        %v329 = vsub.f32 1.5, %v328
        %v330 = vmul.f32 %v325, %v329
        %vm331 = vweird.f32 %v324
        %vm332 = vweird.f32 %v325
        %vm333 = vmor %vm331, %vm332
        %v334 = vsel %vm333, %v325, %v330
        %v335 = vmul.f32 %v318, %v334
        %v337 = vperm.slane %v304, 0
        %v339 = vmul.f32 %v335, %v337
        %v341 = vperm.slane %v305, 0
        %v343 = vadd.f32 %v339, %v341
        %v344 = vpack.c.bf16 %v343, %v343
        %v345 = vld [vmem:[#allocation6] sm:$0xf]
        %v346 = vld [vmem:[#allocation6 + $0x4] sm:$0xf]
        %v347 = vld [vmem:[#allocation6 + $0x8] sm:$0xf]
        %v348 = vld [vmem:[#allocation6 + $0xc] sm:$0xf]
        %v353 = vunpack.c.l.b16 %v345
        %v354 = vunpack.c.l.b16 %v346
        %v355 = vunpack.c.l.b16 %v347
        %v356 = vunpack.c.l.b16 %v348
        %v357 = vpack.c.b16 %v354, %v353
        %v358 = vpack.c.b16 %v356, %v355
        %v362 = vsel %vm306, %v344, 0
        %364 = vmatpush.bf16.msra.mxu0 0
        %365 = vmatpush.bf16.msra.mxu0 0
        %366 = vmatpush.bf16.msra.mxu0 0
        %367 = vmatpush.bf16.msra.mxu0 0
        %368 = vmatpush.bf16.msra.mxu0 0
        %369 = vmatpush.bf16.msra.mxu0 0
        %370 = vmatpush.bf16.msra.mxu0 %v358
        %371 = vmatpush.bf16.msra.mxu0 %v357
        %372 = vmatmul.bf16.gmra.mxu0 %v362
        %v373 = vpop.f32.mrf.mxu0
        %v374 = vadd.f32 0.0, %v373
        %v375 = vpop.f32.mrf.mxu0
        %376 = vdwg.mxu0
        %v377 = vpack.c.bf16 %v374, %v374
        %379 = vrot.lane.b32.xlu0 %v377, 96
        %v380 = vpop.permute.xlu0 %379
        %vm381 = vcmask 64512
        %v383 = vsel %vm381, %v377, 0
        %v386 = vsel %vm381, %v380, 0
        %388 = vmatpush.bf16.xpose.msra.mxu0 0
        %389 = vmatpush.bf16.xpose.msra.mxu0 0
        %390 = vmatpush.bf16.xpose.msra.mxu0 0
        %391 = vmatpush.bf16.xpose.msra.mxu0 0
        %392 = vmatpush.bf16.xpose.msra.mxu0 0
        %393 = vmatpush.bf16.xpose.msra.mxu0 0
        %394 = vmatpush.bf16.xpose.msra.mxu0 0
        %395 = vmatpush.bf16.xpose.msra.mxu0 %v386
        %396 = vmatmul.bf16.gmra.mxu0 %v383
        %v397 = vpop.f32.mrf.mxu0
        %v398 = vadd.f32 0.0, %v397
        %v399 = vpop.f32.mrf.mxu0
        %400 = vdwg.mxu0
        %v401 = vsel %vm381, %v398, -inf
        %402 = vmax.xlane.f32.xlu0 %v401
        %v403 = vpop.xlane.xlu0 %402
        %v404 = vsub.f32 %v398, %v403
        %v405 = vmul.f32 %v404, 1.442695
        %v406 = vpow.pop %v405
        %v407 = vsel %vm381, %v406, 0.0
        %408 = vadd.xlane.f32.xlu0 %v407
        %v409 = vpop.xlane.xlu0 %408
        %v410 = vrcp.pop %v409
        %v411 = vmul.f32 %v406, %v410
        %v412 = vpack.c.bf16 %v411, %v411
        %413 = vrot.lane.b32.xlu0 %v377, 64
        %v414 = vpop.permute.xlu0 %413
        %v416 = vsel %vm381, %v412, 0
        %vm418 = vcmask 1043456
        %v420 = vsel %vm418, %v414, 0
        %422 = vmatpush.bf16.msra.mxu0 0
        %423 = vmatpush.bf16.msra.mxu0 0
        %424 = vmatpush.bf16.msra.mxu0 0
        %425 = vmatpush.bf16.msra.mxu0 0
        %426 = vmatpush.bf16.msra.mxu0 0
        %427 = vmatpush.bf16.msra.mxu0 0
        %428 = vmatpush.bf16.msra.mxu0 0
        %429 = vmatpush.bf16.msra.mxu0 %v420
        %430 = vmatmul.bf16.gmra.mxu0 %v416
        %v431 = vpop.f32.mrf.mxu0
        %v432 = vadd.f32 0.0, %v431
        %v433 = vpop.f32.mrf.mxu0
        %434 = vdwg.mxu0
        %435 = vst.msk [vmem:[#allocation2] sm:$0xff] %vm381, %v432
        %436 = vrot.lane.b32.xlu0 %v377, 120
        %v437 = vpop.permute.xlu0 %436
        %438 = vrot.lane.b32.xlu0 %v377, 88
        %v439 = vpop.permute.xlu0 %438
        %v441 = vsel %vm381, %v437, 0
        %v444 = vsel %vm381, %v439, 0
        %446 = vmatpush.bf16.xpose.msra.mxu0 0
        %447 = vmatpush.bf16.xpose.msra.mxu0 0
        %448 = vmatpush.bf16.xpose.msra.mxu0 0
        %449 = vmatpush.bf16.xpose.msra.mxu0 0
        %450 = vmatpush.bf16.xpose.msra.mxu0 0
        %451 = vmatpush.bf16.xpose.msra.mxu0 0
        %452 = vmatpush.bf16.xpose.msra.mxu0 0
        %453 = vmatpush.bf16.xpose.msra.mxu0 %v444
        %454 = vmatmul.bf16.gmra.mxu0 %v441
        %v455 = vpop.f32.mrf.mxu0
        %v456 = vadd.f32 0.0, %v455
        %v457 = vpop.f32.mrf.mxu0
        %458 = vdwg.mxu0
        %v459 = vsel %vm381, %v456, -inf
        %460 = vmax.xlane.f32.xlu0 %v459
        %v461 = vpop.xlane.xlu0 %460
        %v462 = vsub.f32 %v456, %v461
        %v463 = vmul.f32 %v462, 1.442695
        %v464 = vpow.pop %v463
        %v465 = vsel %vm381, %v464, 0.0
        %466 = vadd.xlane.f32.xlu0 %v465
        %v467 = vpop.xlane.xlu0 %466
        %v468 = vrcp.pop %v467
        %v469 = vmul.f32 %v464, %v468
        %v470 = vpack.c.bf16 %v469, %v469
        %471 = vrot.lane.b32.xlu0 %v377, 56
        %v472 = vpop.permute.xlu0 %471
        %v474 = vsel %vm381, %v470, 0
        %v477 = vsel %vm418, %v472, 0
        %479 = vmatpush.bf16.msra.mxu0 0
        %480 = vmatpush.bf16.msra.mxu0 0
        %481 = vmatpush.bf16.msra.mxu0 0
        %482 = vmatpush.bf16.msra.mxu0 0
        %483 = vmatpush.bf16.msra.mxu0 0
        %484 = vmatpush.bf16.msra.mxu0 0
        %485 = vmatpush.bf16.msra.mxu0 0
        %486 = vmatpush.bf16.msra.mxu0 %v477
        %487 = vmatmul.bf16.gmra.mxu0 %v474
        %v488 = vpop.f32.mrf.mxu0
        %v489 = vadd.f32 0.0, %v488
        %v490 = vpop.f32.mrf.mxu0
        %491 = vdwg.mxu0
        %493 = vrot.lane.b32.xlu0 %v489, 8
        %v494 = vpop.permute.xlu0 %493
        %vm496 = vcmask 130112
        %497 = vst.msk [vmem:[#allocation2] sm:$0xff] %vm496, %v494
        %498 = vrot.lane.b32.xlu0 %v377, 112
        %v499 = vpop.permute.xlu0 %498
        %500 = vrot.lane.b32.xlu0 %v377, 80
        %v501 = vpop.permute.xlu0 %500
        %v503 = vsel %vm381, %v499, 0
        %v506 = vsel %vm381, %v501, 0
        %508 = vmatpush.bf16.xpose.msra.mxu0 0
        %509 = vmatpush.bf16.xpose.msra.mxu0 0
        %510 = vmatpush.bf16.xpose.msra.mxu0 0
        %511 = vmatpush.bf16.xpose.msra.mxu0 0
        %512 = vmatpush.bf16.xpose.msra.mxu0 0
        %513 = vmatpush.bf16.xpose.msra.mxu0 0
        %514 = vmatpush.bf16.xpose.msra.mxu0 0
        %515 = vmatpush.bf16.xpose.msra.mxu0 %v506
        %516 = vmatmul.bf16.gmra.mxu0 %v503
        %v517 = vpop.f32.mrf.mxu0
        %v518 = vadd.f32 0.0, %v517
        %v519 = vpop.f32.mrf.mxu0
        %520 = vdwg.mxu0
        %v521 = vsel %vm381, %v518, -inf
        %522 = vmax.xlane.f32.xlu0 %v521
        %v523 = vpop.xlane.xlu0 %522
        %v524 = vsub.f32 %v518, %v523
        %v525 = vmul.f32 %v524, 1.442695
        %v526 = vpow.pop %v525
        %v527 = vsel %vm381, %v526, 0.0
        %528 = vadd.xlane.f32.xlu0 %v527
        %v529 = vpop.xlane.xlu0 %528
        %v530 = vrcp.pop %v529
        %v531 = vmul.f32 %v526, %v530
        %v532 = vpack.c.bf16 %v531, %v531
        %533 = vrot.lane.b32.xlu0 %v377, 48
        %v534 = vpop.permute.xlu0 %533
        %v536 = vsel %vm381, %v532, 0
        %v539 = vsel %vm418, %v534, 0
        %541 = vmatpush.bf16.msra.mxu0 0
        %542 = vmatpush.bf16.msra.mxu0 0
        %543 = vmatpush.bf16.msra.mxu0 0
        %544 = vmatpush.bf16.msra.mxu0 0
        %545 = vmatpush.bf16.msra.mxu0 0
        %546 = vmatpush.bf16.msra.mxu0 0
        %547 = vmatpush.bf16.msra.mxu0 0
        %548 = vmatpush.bf16.msra.mxu0 %v539
        %549 = vmatmul.bf16.gmra.mxu0 %v536
        %v550 = vpop.f32.mrf.mxu0
        %v551 = vadd.f32 0.0, %v550
        %v552 = vpop.f32.mrf.mxu0
        %553 = vdwg.mxu0
        %555 = vrot.lane.b32.xlu0 %v551, 16
        %v556 = vpop.permute.xlu0 %555
        %vm558 = vcmask 195712
        %559 = vst.msk [vmem:[#allocation2] sm:$0xff] %vm558, %v556
        %560 = vrot.lane.b32.xlu0 %v377, 104
        %v561 = vpop.permute.xlu0 %560
        %562 = vrot.lane.b32.xlu0 %v377, 72
        %v563 = vpop.permute.xlu0 %562
        %v565 = vsel %vm381, %v561, 0
        %v568 = vsel %vm381, %v563, 0
        %570 = vmatpush.bf16.xpose.msra.mxu0 0
        %571 = vmatpush.bf16.xpose.msra.mxu0 0
        %572 = vmatpush.bf16.xpose.msra.mxu0 0
        %573 = vmatpush.bf16.xpose.msra.mxu0 0
        %574 = vmatpush.bf16.xpose.msra.mxu0 0
        %575 = vmatpush.bf16.xpose.msra.mxu0 0
        %576 = vmatpush.bf16.xpose.msra.mxu0 0
        %577 = vmatpush.bf16.xpose.msra.mxu0 %v568
        %578 = vmatmul.bf16.gmra.mxu0 %v565
        %v579 = vpop.f32.mrf.mxu0
        %v580 = vadd.f32 0.0, %v579
        %v581 = vpop.f32.mrf.mxu0
        %582 = vdwg.mxu0
        %v583 = vsel %vm381, %v580, -inf
        %584 = vmax.xlane.f32.xlu0 %v583
        %v585 = vpop.xlane.xlu0 %584
        %v586 = vsub.f32 %v580, %v585
        %v587 = vmul.f32 %v586, 1.442695
        %v588 = vpow.pop %v587
        %v589 = vsel %vm381, %v588, 0.0
        %590 = vadd.xlane.f32.xlu0 %v589
        %v591 = vpop.xlane.xlu0 %590
        %v592 = vrcp.pop %v591
        %v593 = vmul.f32 %v588, %v592
        %v594 = vpack.c.bf16 %v593, %v593
        %595 = vrot.lane.b32.xlu0 %v377, 40
        %v596 = vpop.permute.xlu0 %595
        %v598 = vsel %vm381, %v594, 0
        %v601 = vsel %vm418, %v596, 0
        %603 = vmatpush.bf16.msra.mxu0 0
        %604 = vmatpush.bf16.msra.mxu0 0
        %605 = vmatpush.bf16.msra.mxu0 0
        %606 = vmatpush.bf16.msra.mxu0 0
        %607 = vmatpush.bf16.msra.mxu0 0
        %608 = vmatpush.bf16.msra.mxu0 0
        %609 = vmatpush.bf16.msra.mxu0 0
        %610 = vmatpush.bf16.msra.mxu0 %v601
        %611 = vmatmul.bf16.gmra.mxu0 %v598
        %v612 = vpop.f32.mrf.mxu0
        %v613 = vadd.f32 0.0, %v612
        %v614 = vpop.f32.mrf.mxu0
        %615 = vdwg.mxu0
        %617 = vrot.lane.b32.xlu0 %v613, 24
        %v618 = vpop.permute.xlu0 %617
        %vm620 = vcmask 261312
        %621 = vst.msk [vmem:[#allocation2] sm:$0xff] %vm620, %v618
        %v622 = vld [vmem:[#allocation2] sm:$0xff]
        %v623 = vpack.c.bf16 %v622, %v622
        %v624 = vld [vmem:[#allocation8] sm:$0xf]
        %v625 = vld [vmem:[#allocation8 + $0x4] sm:$0xf]
        %v626 = vld [vmem:[#allocation8 + $0x8] sm:$0xf]
        %v627 = vld [vmem:[#allocation8 + $0xc] sm:$0xf]
        %v628 = vld [vmem:[%s3] sm:$0x1]
        %v630 = vperm.slane %v628, 0
        %v636 = vunpack.c.l.b16 %v624
        %v637 = vunpack.c.l.b16 %v625
        %v638 = vunpack.c.l.b16 %v626
        %v639 = vunpack.c.l.b16 %v627
        %v640 = vpack.c.b16 %v637, %v636
        %v641 = vpack.c.b16 %v639, %v638
        %v645 = vsel %vm306, %v623, 0
        %647 = vmatpush.bf16.msra.mxu0 0
        %648 = vmatpush.bf16.msra.mxu0 0
        %649 = vmatpush.bf16.msra.mxu0 0
        %650 = vmatpush.bf16.msra.mxu0 0
        %651 = vmatpush.bf16.msra.mxu0 0
        %652 = vmatpush.bf16.msra.mxu0 0
        %653 = vmatpush.bf16.msra.mxu0 %v641
        %654 = vmatpush.bf16.msra.mxu0 %v640
        %655 = vmatmul.bf16.gmra.mxu0 %v645
        %v656 = vpop.f32.mrf.mxu0
        %v657 = vadd.f32 %v630, %v656
        %v658 = vpop.f32.mrf.mxu0
        %659 = vdwg.mxu0
        %v660 = vadd.f32 %v303, %v657
        %661 = vst.msk [vmem:[%s301] sm:$0xff] %vm306, %v660
        %s662 = sand.u32 %s163, 1
        %s663 = scalar_lea.sflag [#allocation5], %s662
        %s664 = sand.u32 %s163, 1
        %s665 = smul.addr %s664, 8
        %s666 = scalar_lea.vmem [#allocation9], %s665
        // Predicated region
        $region57: #{tpu_custom_call.1} parent=43 // pred_check
          %p667 = pneg %p173
        $region58: #{tpu_custom_call.1} parent=43 // pred_check_branch
          %669 = sbr.rel (%p667) target = $region60
        $region59: #{tpu_custom_call.1} parent=43 // pred_region
          %671 = vsyncadd %s663, 0
          %s672 = smul.addr %s24, 8
          %s673 = scalar_lea.hbm %s6, %s672
          %s675 = sshll.u32 %s666, 4
          %s676 = int_to_ptr.vmem [resolvable:$true] %s675
          %s677 = sshll.u32 %s673, 4
          %s678 = int_to_ptr.hbm [resolvable:$true] %s677
          %680 = dma.vmem_to_hbm [thread:$0]  %s676, 128, %s678, %s663
        $region60: #{tpu_custom_call.1} parent=43 // pred_fallthru
          _
      $region44: #{tpu_custom_call.1} parent=5 // pred_fallthru
        _
      %p681 = scmp.le.s32.totalorder 2, %s19
      // Predicated region
      $region61: #{tpu_custom_call.1} parent=5 // pred_check
        %p682 = pneg %p681
      $region62: #{tpu_custom_call.1} parent=5 // pred_check_branch
        %684 = sbr.rel (%p682) target = $region64
      $region63: #{tpu_custom_call.1} parent=5 // pred_region
        %s685 = ssub.s32 %s19, 2
        // Predicated region
        $region65: #{tpu_custom_call.1} parent=63 // pred_check
          %p686 = pneg %p179
        $region66: #{tpu_custom_call.1} parent=63 // pred_check_branch
          %688 = sbr.rel (%p686) target = $region68
        $region67: #{tpu_custom_call.1} parent=63 // pred_region
          %s689 = sand.u32 %s164, 1
          %s690 = scalar_lea.sflag [#allocation5], %s689
          %s691 = sand.u32 %s164, 1
          %s692 = smul.addr %s691, 8
          %s693 = scalar_lea.vmem [#allocation9], %s692
          %695 = dma.done %s690, 128
        $region68: #{tpu_custom_call.1} parent=63 // pred_fallthru
          _
      $region64: #{tpu_custom_call.1} parent=5 // pred_fallthru
        _
    $region6: #{tpu_custom_call.1} parent=1 // loop_footer
      %s23 = sadd.s32 1, %s19
    $region7: #{tpu_custom_call.1} parent=1 // loop_footer_branch
      %18 = sbr.rel target = $region3
    $region8: #{tpu_custom_call.1} parent=1 // loop_exit
      _
    %696 = vsyncpa [#allocation4], 1
    %s697 = scalar_lea.sflag [#allocation4], 1
    %698 = vsyncpa %s697, 1
    %699 = vsyncpa [#allocation7], 1
    %700 = vsyncpa [#allocation5], 1
    %s701 = scalar_lea.sflag [#allocation5], 1
    %702 = vsyncpa %s701, 1

</llo_original>
